<compile_context>
chip_gen: v5e
topology: v5e:2x2
jax: 0.10.0
libtpu: 0.0.40
codegen_flags: <defaults>
</compile_context>

<pallas_src>
import functools

import jax
import jax.numpy as jnp
from jax.experimental import pallas as pl
from jax.experimental.pallas import tpu as pltpu  # noqa: F401  (TPU backend)


# ----------------------------- in-kernel helpers -----------------------------

def _layernorm(x, gamma, beta, eps=1e-5):
    # x: (R, F); gamma/beta: (1, F).  Biased variance, like torch.nn.LayerNorm.
    mean = jnp.mean(x, axis=-1, keepdims=True)
    var = jnp.mean((x - mean) ** 2, axis=-1, keepdims=True)
    return (x - mean) * jax.lax.rsqrt(var + eps) * gamma + beta


def _gelu_exact(x):
    # torch.nn.functional.gelu default (erf-based, exact)
    return 0.5 * x * (1.0 + jax.lax.erf(x * 0.7071067811865476))


# ------------------------------ fused kernel ---------------------------------

def _imprint_kernel(x_ref, ctx_ref,
                    gx_ref, bx_ref, gc_ref, bc_ref,
                    wq_ref, wk_ref, wv_ref, wo_ref, bo_ref,
                    gf_ref, bf_ref, w1_ref, b1_ref, w2_ref, b2_ref,
                    o_ref,
                    *, depth, heads, dim_head, batch, n_q, n_kv, hidden):
    scale = dim_head ** (-0.5)
    D = dim_head

    x = x_ref[...].astype(jnp.float32)      # (B*N, E)  residual carrier
    ctx = ctx_ref[...].astype(jnp.float32)  # (B*M, C)

    for d in range(depth):                  # depth static & small -> unrolled
        # ---------------- PreNorm(Attention) + residual ----------------
        xn = _layernorm(x, gx_ref[d], bx_ref[d])      # (B*N, E)
        cn = _layernorm(ctx, gc_ref[d], bc_ref[d])    # (B*M, C)

        # batch folded into sublanes: one MXU issue per projection
        q = jnp.dot(xn, wq_ref[d], preferred_element_type=jnp.float32) * scale  # (B*N, H*D)
        k = jnp.dot(cn, wk_ref[d], preferred_element_type=jnp.float32)          # (B*M, H*D)
        v = jnp.dot(cn, wv_ref[d], preferred_element_type=jnp.float32)          # (B*M, H*D)

        attn_out = None
        for h in range(heads):              # heads static & small -> unrolled
            # lane slice per head, split batch off the sublane axis
            qh = q[:, h * D:(h + 1) * D].reshape(batch, n_q, D)    # (B, N, D)
            kh = k[:, h * D:(h + 1) * D].reshape(batch, n_kv, D)   # (B, M, D)
            vh = v[:, h * D:(h + 1) * D].reshape(batch, n_kv, D)   # (B, M, D)

            sim = jnp.einsum('bnd,bmd->bnm', qh, kh,
                             preferred_element_type=jnp.float32)   # (B, N, M)
            sim = sim - jnp.max(sim, axis=-1, keepdims=True)
            p = jnp.exp(sim)
            p = p * pl.reciprocal(jnp.sum(p, axis=-1, keepdims=True),
                                  approx=True)                     # softmax
            oh = jnp.einsum('bnm,bmd->bnd', p, vh,
                            preferred_element_type=jnp.float32)    # (B, N, D)

            # output projection with this head's weight tile (no lane concat)
            proj = jnp.dot(oh.reshape(batch * n_q, D), wo_ref[d, h],
                           preferred_element_type=jnp.float32)     # (B*N, E)
            attn_out = proj if attn_out is None else attn_out + proj

        x = x + attn_out + bo_ref[d]                               # residual + to_out bias

        # ------------- PreNorm(FeedForward / GEGLU) + residual -------------
        fn = _layernorm(x, gf_ref[d], bf_ref[d])                   # (B*N, E)
        hpre = jnp.dot(fn, w1_ref[d],
                       preferred_element_type=jnp.float32) + b1_ref[d]  # (B*N, 2H)
        a = hpre[:, :hidden]                # value half (128-lane aligned slice)
        g = hpre[:, hidden:]                # gate half
        geglu = a * _gelu_exact(g)
        ff_out = jnp.dot(geglu, w2_ref[d],
                         preferred_element_type=jnp.float32) + b2_ref[d]
        x = x + ff_out                                              # residual

    o_ref[...] = x.astype(o_ref.dtype)


# --------------------------------- wrapper ------------------------------------

def attention_imprint(x, context, params, *, heads, dim_head, hidden):
    B, N, E = x.shape
    _, M, C = context.shape
    depth = params["wq"].shape[0]

    kernel = functools.partial(
        _imprint_kernel, depth=depth, heads=heads, dim_head=dim_head,
        batch=B, n_q=N, n_kv=M, hidden=hidden)

    out2d = pl.pallas_call(
        kernel,
        out_shape=jax.ShapeDtypeStruct((B * N, E), x.dtype),
        # no grid: single invocation, all operands resident in VMEM
        compiler_params=pltpu.CompilerParams(vmem_limit_bytes=64 * 1024 * 1024),
    )(x.reshape(B * N, E), context.reshape(B * M, C),
      params["gx"], params["bx"], params["gc"], params["bc"],
      params["wq"], params["wk"], params["wv"], params["wo"], params["bo"],
      params["gf"], params["bf"], params["w1"], params["b1"],
      params["w2"], params["b2"])
    return out2d.reshape(B, N, E)


# --------------------------------- params --------------------------------------

def init_params(key, *, depth, embed_dim, context_dim, heads, dim_head, ff_expansion):
    inner = heads * dim_head
    hidden = embed_dim * ff_expansion

    def rnd(k, shape):
        return jax.random.normal(k, shape, jnp.float32) * 0.05

    keys = jax.random.split(key, depth * 10)
    wq, wk, wv, wo, bo, w1, b1, w2, b2 = [], [], [], [], [], [], [], [], []
    for i in range(depth):
        ks = keys[i * 10:(i + 1) * 10]
        wq.append(rnd(ks[0], (embed_dim, inner)))
        wk.append(rnd(ks[1], (context_dim, inner)))
        wv.append(rnd(ks[2], (context_dim, inner)))
        # output projection stored per-head: (H, D, E)
        wo.append(rnd(ks[3], (inner, embed_dim)).reshape(heads, dim_head, embed_dim))
        bo.append(rnd(ks[4], (1, embed_dim)))
        w1.append(rnd(ks[5], (embed_dim, 2 * hidden)))
        b1.append(rnd(ks[6], (1, 2 * hidden)))
        w2.append(rnd(ks[7], (hidden, embed_dim)))
        b2.append(rnd(ks[8], (1, embed_dim)))

    ones = lambda n: jnp.ones((depth, 1, n), jnp.float32)
    zeros = lambda n: jnp.zeros((depth, 1, n), jnp.float32)
    return {
        "gx": ones(embed_dim), "bx": zeros(embed_dim),        # attn PreNorm (x)
        "gc": ones(context_dim), "bc": zeros(context_dim),    # attn PreNorm (context)
        "wq": jnp.stack(wq), "wk": jnp.stack(wk), "wv": jnp.stack(wv),
        "wo": jnp.stack(wo), "bo": jnp.stack(bo),
        "gf": ones(embed_dim), "bf": zeros(embed_dim),        # ff PreNorm
        "w1": jnp.stack(w1), "b1": jnp.stack(b1),
        "w2": jnp.stack(w2), "b2": jnp.stack(b2),
    }


# ---------------------------------- main -----------------------------------------

if __name__ == "__main__":
    B, N, M = 2, 8, 16          # batch, query seq, context seq
    EMBED, CTX = 32, 16         # embed_dim, context_dim
    HEADS, DIM_HEAD = 2, 16     # heads, dim_heads
    DEPTH, FF_EXP = 2, 4
    HIDDEN = EMBED * FF_EXP     # 128 -> lane-aligned GEGLU split

    key = jax.random.PRNGKey(0)
    kx, kc, kp = jax.random.split(key, 3)
    x = jax.random.normal(kx, (B, N, EMBED), jnp.float32)
    context = jax.random.normal(kc, (B, M, CTX), jnp.float32)
    params = init_params(kp, depth=DEPTH, embed_dim=EMBED, context_dim=CTX,
                         heads=HEADS, dim_head=DIM_HEAD, ff_expansion=FF_EXP)

    out = attention_imprint(x, context, params,
                            heads=HEADS, dim_head=DIM_HEAD, hidden=HIDDEN)
    jax.block_until_ready(out)
    assert out.shape == (B, N, EMBED)
    # TODO(synk): context_mask path (masked_fill before softmax) not implemented;
    # the reference forward is exercised with context_mask=None.
    print("KERNEL_OK")
</pallas_src>

<mosaic_0001>
module attributes {stable_mosaic.version = 11 : i64} {
  func.func @_imprint_kernel(%arg0: memref<16x32xf32, #tpu.memory_space<vmem>>, %arg1: memref<32x16xf32, #tpu.memory_space<vmem>>, %arg2: memref<2x1x32xf32, #tpu.memory_space<vmem>>, %arg3: memref<2x1x32xf32, #tpu.memory_space<vmem>>, %arg4: memref<2x1x16xf32, #tpu.memory_space<vmem>>, %arg5: memref<2x1x16xf32, #tpu.memory_space<vmem>>, %arg6: memref<2x32x32xf32, #tpu.memory_space<vmem>>, %arg7: memref<2x16x32xf32, #tpu.memory_space<vmem>>, %arg8: memref<2x16x32xf32, #tpu.memory_space<vmem>>, %arg9: memref<2x2x16x32xf32, #tpu.memory_space<vmem>>, %arg10: memref<2x1x32xf32, #tpu.memory_space<vmem>>, %arg11: memref<2x1x32xf32, #tpu.memory_space<vmem>>, %arg12: memref<2x1x32xf32, #tpu.memory_space<vmem>>, %arg13: memref<2x32x256xf32, #tpu.memory_space<vmem>>, %arg14: memref<2x1x256xf32, #tpu.memory_space<vmem>>, %arg15: memref<2x128x32xf32, #tpu.memory_space<vmem>>, %arg16: memref<2x1x32xf32, #tpu.memory_space<vmem>>, %arg17: memref<16x32xf32, #tpu.memory_space<vmem>>) attributes {dimension_semantics = [], scalar_prefetch = 0 : i64, scratch_operands = 0 : i64, tpu.core_type = #tpu.core_type<tc>} {
    %c0 = arith.constant 0 : index
    %c0_0 = arith.constant 0 : index
    %0 = vector.load %arg0[%c0, %c0_0] : memref<16x32xf32, #tpu.memory_space<vmem>>, vector<16x32xf32>
    %c0_1 = arith.constant 0 : index
    %c0_2 = arith.constant 0 : index
    %1 = vector.load %arg1[%c0_1, %c0_2] : memref<32x16xf32, #tpu.memory_space<vmem>>, vector<32x16xf32>
    %c0_3 = arith.constant 0 : index
    %c0_4 = arith.constant 0 : index
    %c0_5 = arith.constant 0 : index
    %2 = vector.load %arg2[%c0_3, %c0_4, %c0_5] : memref<2x1x32xf32, #tpu.memory_space<vmem>>, vector<1x1x32xf32>
    %3 = vector.shape_cast %2 : vector<1x1x32xf32> to vector<1x32xf32>
    %c0_6 = arith.constant 0 : index
    %c0_7 = arith.constant 0 : index
    %c0_8 = arith.constant 0 : index
    %4 = vector.load %arg3[%c0_6, %c0_7, %c0_8] : memref<2x1x32xf32, #tpu.memory_space<vmem>>, vector<1x1x32xf32>
    %5 = vector.shape_cast %4 : vector<1x1x32xf32> to vector<1x32xf32>
    %cst = arith.constant dense<0.000000e+00> : vector<16xf32>
    %6 = vector.multi_reduction <add>, %0, %cst [1] : vector<16x32xf32> to vector<16xf32>
    %7 = vector.shape_cast %6 : vector<16xf32> to vector<16x1xf32>
    %cst_9 = arith.constant 3.200000e+01 : f32
    %8 = vector.broadcast %cst_9 : f32 to vector<16x1xf32>
    %9 = arith.divf %7, %8 : vector<16x1xf32>
    %10 = vector.broadcast %9 : vector<16x1xf32> to vector<16x32xf32>
    %11 = arith.subf %0, %10 : vector<16x32xf32>
    %12 = arith.mulf %11, %11 : vector<16x32xf32>
    %cst_10 = arith.constant dense<0.000000e+00> : vector<16xf32>
    %13 = vector.multi_reduction <add>, %12, %cst_10 [1] : vector<16x32xf32> to vector<16xf32>
    %14 = vector.shape_cast %13 : vector<16xf32> to vector<16x1xf32>
    %cst_11 = arith.constant 3.200000e+01 : f32
    %15 = vector.broadcast %cst_11 : f32 to vector<16x1xf32>
    %16 = arith.divf %14, %15 : vector<16x1xf32>
    %17 = vector.broadcast %9 : vector<16x1xf32> to vector<16x32xf32>
    %18 = arith.subf %0, %17 : vector<16x32xf32>
    %cst_12 = arith.constant 9.99999974E-6 : f32
    %19 = vector.broadcast %cst_12 : f32 to vector<16x1xf32>
    %20 = arith.addf %16, %19 : vector<16x1xf32>
    %21 = math.rsqrt %20 : vector<16x1xf32>
    %22 = vector.broadcast %21 : vector<16x1xf32> to vector<16x32xf32>
    %23 = arith.mulf %18, %22 : vector<16x32xf32>
    %24 = vector.broadcast %3 : vector<1x32xf32> to vector<16x32xf32>
    %25 = arith.mulf %23, %24 : vector<16x32xf32>
    %26 = vector.broadcast %5 : vector<1x32xf32> to vector<16x32xf32>
    %27 = arith.addf %25, %26 : vector<16x32xf32>
    %c0_13 = arith.constant 0 : index
    %c0_14 = arith.constant 0 : index
    %c0_15 = arith.constant 0 : index
    %28 = vector.load %arg4[%c0_13, %c0_14, %c0_15] : memref<2x1x16xf32, #tpu.memory_space<vmem>>, vector<1x1x16xf32>
    %29 = vector.shape_cast %28 : vector<1x1x16xf32> to vector<1x16xf32>
    %c0_16 = arith.constant 0 : index
    %c0_17 = arith.constant 0 : index
    %c0_18 = arith.constant 0 : index
    %30 = vector.load %arg5[%c0_16, %c0_17, %c0_18] : memref<2x1x16xf32, #tpu.memory_space<vmem>>, vector<1x1x16xf32>
    %31 = vector.shape_cast %30 : vector<1x1x16xf32> to vector<1x16xf32>
    %cst_19 = arith.constant dense<0.000000e+00> : vector<32xf32>
    %32 = vector.multi_reduction <add>, %1, %cst_19 [1] : vector<32x16xf32> to vector<32xf32>
    %33 = vector.shape_cast %32 : vector<32xf32> to vector<32x1xf32>
    %cst_20 = arith.constant 1.600000e+01 : f32
    %34 = vector.broadcast %cst_20 : f32 to vector<32x1xf32>
    %35 = arith.divf %33, %34 : vector<32x1xf32>
    %36 = vector.broadcast %35 : vector<32x1xf32> to vector<32x16xf32>
    %37 = arith.subf %1, %36 : vector<32x16xf32>
    %38 = arith.mulf %37, %37 : vector<32x16xf32>
    %cst_21 = arith.constant dense<0.000000e+00> : vector<32xf32>
    %39 = vector.multi_reduction <add>, %38, %cst_21 [1] : vector<32x16xf32> to vector<32xf32>
    %40 = vector.shape_cast %39 : vector<32xf32> to vector<32x1xf32>
    %cst_22 = arith.constant 1.600000e+01 : f32
    %41 = vector.broadcast %cst_22 : f32 to vector<32x1xf32>
    %42 = arith.divf %40, %41 : vector<32x1xf32>
    %43 = vector.broadcast %35 : vector<32x1xf32> to vector<32x16xf32>
    %44 = arith.subf %1, %43 : vector<32x16xf32>
    %cst_23 = arith.constant 9.99999974E-6 : f32
    %45 = vector.broadcast %cst_23 : f32 to vector<32x1xf32>
    %46 = arith.addf %42, %45 : vector<32x1xf32>
    %47 = math.rsqrt %46 : vector<32x1xf32>
    %48 = vector.broadcast %47 : vector<32x1xf32> to vector<32x16xf32>
    %49 = arith.mulf %44, %48 : vector<32x16xf32>
    %50 = vector.broadcast %29 : vector<1x16xf32> to vector<32x16xf32>
    %51 = arith.mulf %49, %50 : vector<32x16xf32>
    %52 = vector.broadcast %31 : vector<1x16xf32> to vector<32x16xf32>
    %53 = arith.addf %51, %52 : vector<32x16xf32>
    %c0_24 = arith.constant 0 : index
    %c0_25 = arith.constant 0 : index
    %c0_26 = arith.constant 0 : index
    %54 = vector.load %arg6[%c0_24, %c0_25, %c0_26] : memref<2x32x32xf32, #tpu.memory_space<vmem>>, vector<1x32x32xf32>
    %55 = vector.shape_cast %54 : vector<1x32x32xf32> to vector<32x32xf32>
    %cst_27 = arith.constant dense<0.000000e+00> : vector<16x32xf32>
    %56 = tpu.matmul %27, %55, %cst_27 {dimension_numbers = #tpu.dot_dimension_numbers<[1], [0], [0], [1], [0, 0, 1, 1], [], []>} : vector<16x32xf32>, vector<32x32xf32>, vector<16x32xf32> -> vector<16x32xf32>
    %cst_28 = arith.constant 2.500000e-01 : f32
    %57 = vector.broadcast %cst_28 : f32 to vector<16x32xf32>
    %58 = arith.mulf %56, %57 : vector<16x32xf32>
    %c0_29 = arith.constant 0 : index
    %c0_30 = arith.constant 0 : index
    %c0_31 = arith.constant 0 : index
    %59 = vector.load %arg7[%c0_29, %c0_30, %c0_31] : memref<2x16x32xf32, #tpu.memory_space<vmem>>, vector<1x16x32xf32>
    %60 = vector.shape_cast %59 : vector<1x16x32xf32> to vector<16x32xf32>
    %cst_32 = arith.constant dense<0.000000e+00> : vector<32x32xf32>
    %61 = tpu.matmul %53, %60, %cst_32 {dimension_numbers = #tpu.dot_dimension_numbers<[1], [0], [0], [1], [0, 0, 1, 1], [], []>} : vector<32x16xf32>, vector<16x32xf32>, vector<32x32xf32> -> vector<32x32xf32>
    %c0_33 = arith.constant 0 : index
    %c0_34 = arith.constant 0 : index
    %c0_35 = arith.constant 0 : index
    %62 = vector.load %arg8[%c0_33, %c0_34, %c0_35] : memref<2x16x32xf32, #tpu.memory_space<vmem>>, vector<1x16x32xf32>
    %63 = vector.shape_cast %62 : vector<1x16x32xf32> to vector<16x32xf32>
    %cst_36 = arith.constant dense<0.000000e+00> : vector<32x32xf32>
    %64 = tpu.matmul %53, %63, %cst_36 {dimension_numbers = #tpu.dot_dimension_numbers<[1], [0], [0], [1], [0, 0, 1, 1], [], []>} : vector<32x16xf32>, vector<16x32xf32>, vector<32x32xf32> -> vector<32x32xf32>
    %65 = vector.extract_strided_slice %58 {offsets = [0, 0], sizes = [16, 16], strides = [1, 1]} : vector<16x32xf32> to vector<16x16xf32>
    %66 = vector.shape_cast %65 : vector<16x16xf32> to vector<2x8x16xf32>
    %67 = vector.extract_strided_slice %61 {offsets = [0, 0], sizes = [32, 16], strides = [1, 1]} : vector<32x32xf32> to vector<32x16xf32>
    %68 = vector.shape_cast %67 : vector<32x16xf32> to vector<2x16x16xf32>
    %69 = vector.extract_strided_slice %64 {offsets = [0, 0], sizes = [32, 16], strides = [1, 1]} : vector<32x32xf32> to vector<32x16xf32>
    %70 = vector.shape_cast %69 : vector<32x16xf32> to vector<2x16x16xf32>
    "tpu.trace_start"() <{level = 10 : i32, message = "bnd,bmd->bnm"}> : () -> ()
    %cst_37 = arith.constant dense<0.000000e+00> : vector<2x8x16xf32>
    %71 = tpu.matmul %66, %68, %cst_37 {dimension_numbers = #tpu.dot_dimension_numbers<[2], [2], [1], [1], [0, 0, 0, 1, 1, 1], [0], [0]>} : vector<2x8x16xf32>, vector<2x16x16xf32>, vector<2x8x16xf32> -> vector<2x8x16xf32>
    "tpu.trace_stop"() : () -> ()
    %cst_38 = arith.constant dense<0xFF800000> : vector<2x8xf32>
    %72 = vector.multi_reduction <maximumf>, %71, %cst_38 [2] : vector<2x8x16xf32> to vector<2x8xf32>
    %73 = vector.shape_cast %72 : vector<2x8xf32> to vector<2x8x1xf32>
    %74 = vector.broadcast %73 : vector<2x8x1xf32> to vector<2x8x16xf32>
    %75 = arith.subf %71, %74 : vector<2x8x16xf32>
    %76 = math.exp %75 : vector<2x8x16xf32>
    %cst_39 = arith.constant dense<0.000000e+00> : vector<2x8xf32>
    %77 = vector.multi_reduction <add>, %76, %cst_39 [2] : vector<2x8x16xf32> to vector<2x8xf32>
    %78 = vector.shape_cast %77 : vector<2x8xf32> to vector<2x8x1xf32>
    %79 = tpu.reciprocal %78 {approx = true} : vector<2x8x1xf32> -> vector<2x8x1xf32>
    %80 = vector.broadcast %79 : vector<2x8x1xf32> to vector<2x8x16xf32>
    %81 = arith.mulf %76, %80 : vector<2x8x16xf32>
    "tpu.trace_start"() <{level = 10 : i32, message = "bnm,bmd->bnd"}> : () -> ()
    %cst_40 = arith.constant dense<0.000000e+00> : vector<2x8x16xf32>
    %82 = tpu.matmul %81, %70, %cst_40 {dimension_numbers = #tpu.dot_dimension_numbers<[2], [1], [1], [2], [0, 0, 0, 1, 1, 2], [0], [0]>} : vector<2x8x16xf32>, vector<2x16x16xf32>, vector<2x8x16xf32> -> vector<2x8x16xf32>
    "tpu.trace_stop"() : () -> ()
    %83 = vector.shape_cast %82 : vector<2x8x16xf32> to vector<16x16xf32>
    %c0_41 = arith.constant 0 : index
    %c0_42 = arith.constant 0 : index
    %c0_43 = arith.constant 0 : index
    %c0_44 = arith.constant 0 : index
    %84 = vector.load %arg9[%c0_41, %c0_42, %c0_43, %c0_44] : memref<2x2x16x32xf32, #tpu.memory_space<vmem>>, vector<1x1x16x32xf32>
    %85 = vector.shape_cast %84 : vector<1x1x16x32xf32> to vector<16x32xf32>
    %cst_45 = arith.constant dense<0.000000e+00> : vector<16x32xf32>
    %86 = tpu.matmul %83, %85, %cst_45 {dimension_numbers = #tpu.dot_dimension_numbers<[1], [0], [0], [1], [0, 0, 1, 1], [], []>} : vector<16x16xf32>, vector<16x32xf32>, vector<16x32xf32> -> vector<16x32xf32>
    %87 = vector.extract_strided_slice %58 {offsets = [0, 16], sizes = [16, 16], strides = [1, 1]} : vector<16x32xf32> to vector<16x16xf32>
    %88 = vector.shape_cast %87 : vector<16x16xf32> to vector<2x8x16xf32>
    %89 = vector.extract_strided_slice %61 {offsets = [0, 16], sizes = [32, 16], strides = [1, 1]} : vector<32x32xf32> to vector<32x16xf32>
    %90 = vector.shape_cast %89 : vector<32x16xf32> to vector<2x16x16xf32>
    %91 = vector.extract_strided_slice %64 {offsets = [0, 16], sizes = [32, 16], strides = [1, 1]} : vector<32x32xf32> to vector<32x16xf32>
    %92 = vector.shape_cast %91 : vector<32x16xf32> to vector<2x16x16xf32>
    "tpu.trace_start"() <{level = 10 : i32, message = "bnd,bmd->bnm"}> : () -> ()
    %cst_46 = arith.constant dense<0.000000e+00> : vector<2x8x16xf32>
    %93 = tpu.matmul %88, %90, %cst_46 {dimension_numbers = #tpu.dot_dimension_numbers<[2], [2], [1], [1], [0, 0, 0, 1, 1, 1], [0], [0]>} : vector<2x8x16xf32>, vector<2x16x16xf32>, vector<2x8x16xf32> -> vector<2x8x16xf32>
    "tpu.trace_stop"() : () -> ()
    %cst_47 = arith.constant dense<0xFF800000> : vector<2x8xf32>
    %94 = vector.multi_reduction <maximumf>, %93, %cst_47 [2] : vector<2x8x16xf32> to vector<2x8xf32>
    %95 = vector.shape_cast %94 : vector<2x8xf32> to vector<2x8x1xf32>
    %96 = vector.broadcast %95 : vector<2x8x1xf32> to vector<2x8x16xf32>
    %97 = arith.subf %93, %96 : vector<2x8x16xf32>
    %98 = math.exp %97 : vector<2x8x16xf32>
    %cst_48 = arith.constant dense<0.000000e+00> : vector<2x8xf32>
    %99 = vector.multi_reduction <add>, %98, %cst_48 [2] : vector<2x8x16xf32> to vector<2x8xf32>
    %100 = vector.shape_cast %99 : vector<2x8xf32> to vector<2x8x1xf32>
    %101 = tpu.reciprocal %100 {approx = true} : vector<2x8x1xf32> -> vector<2x8x1xf32>
    %102 = vector.broadcast %101 : vector<2x8x1xf32> to vector<2x8x16xf32>
    %103 = arith.mulf %98, %102 : vector<2x8x16xf32>
    "tpu.trace_start"() <{level = 10 : i32, message = "bnm,bmd->bnd"}> : () -> ()
    %cst_49 = arith.constant dense<0.000000e+00> : vector<2x8x16xf32>
    %104 = tpu.matmul %103, %92, %cst_49 {dimension_numbers = #tpu.dot_dimension_numbers<[2], [1], [1], [2], [0, 0, 0, 1, 1, 2], [0], [0]>} : vector<2x8x16xf32>, vector<2x16x16xf32>, vector<2x8x16xf32> -> vector<2x8x16xf32>
    "tpu.trace_stop"() : () -> ()
    %105 = vector.shape_cast %104 : vector<2x8x16xf32> to vector<16x16xf32>
    %c0_50 = arith.constant 0 : index
    %c1 = arith.constant 1 : index
    %c0_51 = arith.constant 0 : index
    %c0_52 = arith.constant 0 : index
    %106 = vector.load %arg9[%c0_50, %c1, %c0_51, %c0_52] : memref<2x2x16x32xf32, #tpu.memory_space<vmem>>, vector<1x1x16x32xf32>
    %107 = vector.shape_cast %106 : vector<1x1x16x32xf32> to vector<16x32xf32>
    %cst_53 = arith.constant dense<0.000000e+00> : vector<16x32xf32>
    %108 = tpu.matmul %105, %107, %cst_53 {dimension_numbers = #tpu.dot_dimension_numbers<[1], [0], [0], [1], [0, 0, 1, 1], [], []>} : vector<16x16xf32>, vector<16x32xf32>, vector<16x32xf32> -> vector<16x32xf32>
    %109 = arith.addf %86, %108 : vector<16x32xf32>
    %110 = arith.addf %0, %109 : vector<16x32xf32>
    %c0_54 = arith.constant 0 : index
    %c0_55 = arith.constant 0 : index
    %c0_56 = arith.constant 0 : index
    %111 = vector.load %arg10[%c0_54, %c0_55, %c0_56] : memref<2x1x32xf32, #tpu.memory_space<vmem>>, vector<1x1x32xf32>
    %112 = vector.shape_cast %111 : vector<1x1x32xf32> to vector<1x32xf32>
    %113 = vector.broadcast %112 : vector<1x32xf32> to vector<16x32xf32>
    %114 = arith.addf %110, %113 : vector<16x32xf32>
    %c0_57 = arith.constant 0 : index
    %c0_58 = arith.constant 0 : index
    %c0_59 = arith.constant 0 : index
    %115 = vector.load %arg11[%c0_57, %c0_58, %c0_59] : memref<2x1x32xf32, #tpu.memory_space<vmem>>, vector<1x1x32xf32>
    %116 = vector.shape_cast %115 : vector<1x1x32xf32> to vector<1x32xf32>
    %c0_60 = arith.constant 0 : index
    %c0_61 = arith.constant 0 : index
    %c0_62 = arith.constant 0 : index
    %117 = vector.load %arg12[%c0_60, %c0_61, %c0_62] : memref<2x1x32xf32, #tpu.memory_space<vmem>>, vector<1x1x32xf32>
    %118 = vector.shape_cast %117 : vector<1x1x32xf32> to vector<1x32xf32>
    %cst_63 = arith.constant dense<0.000000e+00> : vector<16xf32>
    %119 = vector.multi_reduction <add>, %114, %cst_63 [1] : vector<16x32xf32> to vector<16xf32>
    %120 = vector.shape_cast %119 : vector<16xf32> to vector<16x1xf32>
    %cst_64 = arith.constant 3.200000e+01 : f32
    %121 = vector.broadcast %cst_64 : f32 to vector<16x1xf32>
    %122 = arith.divf %120, %121 : vector<16x1xf32>
    %123 = vector.broadcast %122 : vector<16x1xf32> to vector<16x32xf32>
    %124 = arith.subf %114, %123 : vector<16x32xf32>
    %125 = arith.mulf %124, %124 : vector<16x32xf32>
    %cst_65 = arith.constant dense<0.000000e+00> : vector<16xf32>
    %126 = vector.multi_reduction <add>, %125, %cst_65 [1] : vector<16x32xf32> to vector<16xf32>
    %127 = vector.shape_cast %126 : vector<16xf32> to vector<16x1xf32>
    %cst_66 = arith.constant 3.200000e+01 : f32
    %128 = vector.broadcast %cst_66 : f32 to vector<16x1xf32>
    %129 = arith.divf %127, %128 : vector<16x1xf32>
    %130 = vector.broadcast %122 : vector<16x1xf32> to vector<16x32xf32>
    %131 = arith.subf %114, %130 : vector<16x32xf32>
    %cst_67 = arith.constant 9.99999974E-6 : f32
    %132 = vector.broadcast %cst_67 : f32 to vector<16x1xf32>
    %133 = arith.addf %129, %132 : vector<16x1xf32>
    %134 = math.rsqrt %133 : vector<16x1xf32>
    %135 = vector.broadcast %134 : vector<16x1xf32> to vector<16x32xf32>
    %136 = arith.mulf %131, %135 : vector<16x32xf32>
    %137 = vector.broadcast %116 : vector<1x32xf32> to vector<16x32xf32>
    %138 = arith.mulf %136, %137 : vector<16x32xf32>
    %139 = vector.broadcast %118 : vector<1x32xf32> to vector<16x32xf32>
    %140 = arith.addf %138, %139 : vector<16x32xf32>
    %c0_68 = arith.constant 0 : index
    %c0_69 = arith.constant 0 : index
    %c0_70 = arith.constant 0 : index
    %141 = vector.load %arg13[%c0_68, %c0_69, %c0_70] : memref<2x32x256xf32, #tpu.memory_space<vmem>>, vector<1x32x256xf32>
    %142 = vector.shape_cast %141 : vector<1x32x256xf32> to vector<32x256xf32>
    %cst_71 = arith.constant dense<0.000000e+00> : vector<16x256xf32>
    %143 = tpu.matmul %140, %142, %cst_71 {dimension_numbers = #tpu.dot_dimension_numbers<[1], [0], [0], [1], [0, 0, 1, 1], [], []>} : vector<16x32xf32>, vector<32x256xf32>, vector<16x256xf32> -> vector<16x256xf32>
    %c0_72 = arith.constant 0 : index
    %c0_73 = arith.constant 0 : index
    %c0_74 = arith.constant 0 : index
    %144 = vector.load %arg14[%c0_72, %c0_73, %c0_74] : memref<2x1x256xf32, #tpu.memory_space<vmem>>, vector<1x1x256xf32>
    %145 = vector.shape_cast %144 : vector<1x1x256xf32> to vector<1x256xf32>
    %146 = vector.broadcast %145 : vector<1x256xf32> to vector<16x256xf32>
    %147 = arith.addf %143, %146 : vector<16x256xf32>
    %148 = vector.extract_strided_slice %147 {offsets = [0, 0], sizes = [16, 128], strides = [1, 1]} : vector<16x256xf32> to vector<16x128xf32>
    %149 = vector.extract_strided_slice %147 {offsets = [0, 128], sizes = [16, 128], strides = [1, 1]} : vector<16x256xf32> to vector<16x128xf32>
    %cst_75 = arith.constant 5.000000e-01 : f32
    %150 = vector.broadcast %cst_75 : f32 to vector<16x128xf32>
    %151 = arith.mulf %150, %149 : vector<16x128xf32>
    %cst_76 = arith.constant 0.707106769 : f32
    %152 = vector.broadcast %cst_76 : f32 to vector<16x128xf32>
    %153 = arith.mulf %149, %152 : vector<16x128xf32>
    %154 = math.erf %153 : vector<16x128xf32>
    %cst_77 = arith.constant 1.000000e+00 : f32
    %155 = vector.broadcast %cst_77 : f32 to vector<16x128xf32>
    %156 = arith.addf %155, %154 : vector<16x128xf32>
    %157 = arith.mulf %151, %156 : vector<16x128xf32>
    %158 = arith.mulf %148, %157 : vector<16x128xf32>
    %c0_78 = arith.constant 0 : index
    %c0_79 = arith.constant 0 : index
    %c0_80 = arith.constant 0 : index
    %159 = vector.load %arg15[%c0_78, %c0_79, %c0_80] : memref<2x128x32xf32, #tpu.memory_space<vmem>>, vector<1x128x32xf32>
    %160 = vector.shape_cast %159 : vector<1x128x32xf32> to vector<128x32xf32>
    %cst_81 = arith.constant dense<0.000000e+00> : vector<16x32xf32>
    %161 = tpu.matmul %158, %160, %cst_81 {dimension_numbers = #tpu.dot_dimension_numbers<[1], [0], [0], [1], [0, 0, 1, 1], [], []>} : vector<16x128xf32>, vector<128x32xf32>, vector<16x32xf32> -> vector<16x32xf32>
    %c0_82 = arith.constant 0 : index
    %c0_83 = arith.constant 0 : index
    %c0_84 = arith.constant 0 : index
    %162 = vector.load %arg16[%c0_82, %c0_83, %c0_84] : memref<2x1x32xf32, #tpu.memory_space<vmem>>, vector<1x1x32xf32>
    %163 = vector.shape_cast %162 : vector<1x1x32xf32> to vector<1x32xf32>
    %164 = vector.broadcast %163 : vector<1x32xf32> to vector<16x32xf32>
    %165 = arith.addf %161, %164 : vector<16x32xf32>
    %166 = arith.addf %114, %165 : vector<16x32xf32>
    %c1_85 = arith.constant 1 : index
    %c0_86 = arith.constant 0 : index
    %c0_87 = arith.constant 0 : index
    %167 = vector.load %arg2[%c1_85, %c0_86, %c0_87] : memref<2x1x32xf32, #tpu.memory_space<vmem>>, vector<1x1x32xf32>
    %168 = vector.shape_cast %167 : vector<1x1x32xf32> to vector<1x32xf32>
    %c1_88 = arith.constant 1 : index
    %c0_89 = arith.constant 0 : index
    %c0_90 = arith.constant 0 : index
    %169 = vector.load %arg3[%c1_88, %c0_89, %c0_90] : memref<2x1x32xf32, #tpu.memory_space<vmem>>, vector<1x1x32xf32>
    %170 = vector.shape_cast %169 : vector<1x1x32xf32> to vector<1x32xf32>
    %cst_91 = arith.constant dense<0.000000e+00> : vector<16xf32>
    %171 = vector.multi_reduction <add>, %166, %cst_91 [1] : vector<16x32xf32> to vector<16xf32>
    %172 = vector.shape_cast %171 : vector<16xf32> to vector<16x1xf32>
    %cst_92 = arith.constant 3.200000e+01 : f32
    %173 = vector.broadcast %cst_92 : f32 to vector<16x1xf32>
    %174 = arith.divf %172, %173 : vector<16x1xf32>
    %175 = vector.broadcast %174 : vector<16x1xf32> to vector<16x32xf32>
    %176 = arith.subf %166, %175 : vector<16x32xf32>
    %177 = arith.mulf %176, %176 : vector<16x32xf32>
    %cst_93 = arith.constant dense<0.000000e+00> : vector<16xf32>
    %178 = vector.multi_reduction <add>, %177, %cst_93 [1] : vector<16x32xf32> to vector<16xf32>
    %179 = vector.shape_cast %178 : vector<16xf32> to vector<16x1xf32>
    %cst_94 = arith.constant 3.200000e+01 : f32
    %180 = vector.broadcast %cst_94 : f32 to vector<16x1xf32>
    %181 = arith.divf %179, %180 : vector<16x1xf32>
    %182 = vector.broadcast %174 : vector<16x1xf32> to vector<16x32xf32>
    %183 = arith.subf %166, %182 : vector<16x32xf32>
    %cst_95 = arith.constant 9.99999974E-6 : f32
    %184 = vector.broadcast %cst_95 : f32 to vector<16x1xf32>
    %185 = arith.addf %181, %184 : vector<16x1xf32>
    %186 = math.rsqrt %185 : vector<16x1xf32>
    %187 = vector.broadcast %186 : vector<16x1xf32> to vector<16x32xf32>
    %188 = arith.mulf %183, %187 : vector<16x32xf32>
    %189 = vector.broadcast %168 : vector<1x32xf32> to vector<16x32xf32>
    %190 = arith.mulf %188, %189 : vector<16x32xf32>
    %191 = vector.broadcast %170 : vector<1x32xf32> to vector<16x32xf32>
    %192 = arith.addf %190, %191 : vector<16x32xf32>
    %c1_96 = arith.constant 1 : index
    %c0_97 = arith.constant 0 : index
    %c0_98 = arith.constant 0 : index
    %193 = vector.load %arg4[%c1_96, %c0_97, %c0_98] : memref<2x1x16xf32, #tpu.memory_space<vmem>>, vector<1x1x16xf32>
    %194 = vector.shape_cast %193 : vector<1x1x16xf32> to vector<1x16xf32>
    %c1_99 = arith.constant 1 : index
    %c0_100 = arith.constant 0 : index
    %c0_101 = arith.constant 0 : index
    %195 = vector.load %arg5[%c1_99, %c0_100, %c0_101] : memref<2x1x16xf32, #tpu.memory_space<vmem>>, vector<1x1x16xf32>
    %196 = vector.shape_cast %195 : vector<1x1x16xf32> to vector<1x16xf32>
    %cst_102 = arith.constant dense<0.000000e+00> : vector<32xf32>
    %197 = vector.multi_reduction <add>, %1, %cst_102 [1] : vector<32x16xf32> to vector<32xf32>
    %198 = vector.shape_cast %197 : vector<32xf32> to vector<32x1xf32>
    %cst_103 = arith.constant 1.600000e+01 : f32
    %199 = vector.broadcast %cst_103 : f32 to vector<32x1xf32>
    %200 = arith.divf %198, %199 : vector<32x1xf32>
    %201 = vector.broadcast %200 : vector<32x1xf32> to vector<32x16xf32>
    %202 = arith.subf %1, %201 : vector<32x16xf32>
    %203 = arith.mulf %202, %202 : vector<32x16xf32>
    %cst_104 = arith.constant dense<0.000000e+00> : vector<32xf32>
    %204 = vector.multi_reduction <add>, %203, %cst_104 [1] : vector<32x16xf32> to vector<32xf32>
    %205 = vector.shape_cast %204 : vector<32xf32> to vector<32x1xf32>
    %cst_105 = arith.constant 1.600000e+01 : f32
    %206 = vector.broadcast %cst_105 : f32 to vector<32x1xf32>
    %207 = arith.divf %205, %206 : vector<32x1xf32>
    %208 = vector.broadcast %200 : vector<32x1xf32> to vector<32x16xf32>
    %209 = arith.subf %1, %208 : vector<32x16xf32>
    %cst_106 = arith.constant 9.99999974E-6 : f32
    %210 = vector.broadcast %cst_106 : f32 to vector<32x1xf32>
    %211 = arith.addf %207, %210 : vector<32x1xf32>
    %212 = math.rsqrt %211 : vector<32x1xf32>
    %213 = vector.broadcast %212 : vector<32x1xf32> to vector<32x16xf32>
    %214 = arith.mulf %209, %213 : vector<32x16xf32>
    %215 = vector.broadcast %194 : vector<1x16xf32> to vector<32x16xf32>
    %216 = arith.mulf %214, %215 : vector<32x16xf32>
    %217 = vector.broadcast %196 : vector<1x16xf32> to vector<32x16xf32>
    %218 = arith.addf %216, %217 : vector<32x16xf32>
    %c1_107 = arith.constant 1 : index
    %c0_108 = arith.constant 0 : index
    %c0_109 = arith.constant 0 : index
    %219 = vector.load %arg6[%c1_107, %c0_108, %c0_109] : memref<2x32x32xf32, #tpu.memory_space<vmem>>, vector<1x32x32xf32>
    %220 = vector.shape_cast %219 : vector<1x32x32xf32> to vector<32x32xf32>
    %cst_110 = arith.constant dense<0.000000e+00> : vector<16x32xf32>
    %221 = tpu.matmul %192, %220, %cst_110 {dimension_numbers = #tpu.dot_dimension_numbers<[1], [0], [0], [1], [0, 0, 1, 1], [], []>} : vector<16x32xf32>, vector<32x32xf32>, vector<16x32xf32> -> vector<16x32xf32>
    %cst_111 = arith.constant 2.500000e-01 : f32
    %222 = vector.broadcast %cst_111 : f32 to vector<16x32xf32>
    %223 = arith.mulf %221, %222 : vector<16x32xf32>
    %c1_112 = arith.constant 1 : index
    %c0_113 = arith.constant 0 : index
    %c0_114 = arith.constant 0 : index
    %224 = vector.load %arg7[%c1_112, %c0_113, %c0_114] : memref<2x16x32xf32, #tpu.memory_space<vmem>>, vector<1x16x32xf32>
    %225 = vector.shape_cast %224 : vector<1x16x32xf32> to vector<16x32xf32>
    %cst_115 = arith.constant dense<0.000000e+00> : vector<32x32xf32>
    %226 = tpu.matmul %218, %225, %cst_115 {dimension_numbers = #tpu.dot_dimension_numbers<[1], [0], [0], [1], [0, 0, 1, 1], [], []>} : vector<32x16xf32>, vector<16x32xf32>, vector<32x32xf32> -> vector<32x32xf32>
    %c1_116 = arith.constant 1 : index
    %c0_117 = arith.constant 0 : index
    %c0_118 = arith.constant 0 : index
    %227 = vector.load %arg8[%c1_116, %c0_117, %c0_118] : memref<2x16x32xf32, #tpu.memory_space<vmem>>, vector<1x16x32xf32>
    %228 = vector.shape_cast %227 : vector<1x16x32xf32> to vector<16x32xf32>
    %cst_119 = arith.constant dense<0.000000e+00> : vector<32x32xf32>
    %229 = tpu.matmul %218, %228, %cst_119 {dimension_numbers = #tpu.dot_dimension_numbers<[1], [0], [0], [1], [0, 0, 1, 1], [], []>} : vector<32x16xf32>, vector<16x32xf32>, vector<32x32xf32> -> vector<32x32xf32>
    %230 = vector.extract_strided_slice %223 {offsets = [0, 0], sizes = [16, 16], strides = [1, 1]} : vector<16x32xf32> to vector<16x16xf32>
    %231 = vector.shape_cast %230 : vector<16x16xf32> to vector<2x8x16xf32>
    %232 = vector.extract_strided_slice %226 {offsets = [0, 0], sizes = [32, 16], strides = [1, 1]} : vector<32x32xf32> to vector<32x16xf32>
    %233 = vector.shape_cast %232 : vector<32x16xf32> to vector<2x16x16xf32>
    %234 = vector.extract_strided_slice %229 {offsets = [0, 0], sizes = [32, 16], strides = [1, 1]} : vector<32x32xf32> to vector<32x16xf32>
    %235 = vector.shape_cast %234 : vector<32x16xf32> to vector<2x16x16xf32>
    "tpu.trace_start"() <{level = 10 : i32, message = "bnd,bmd->bnm"}> : () -> ()
    %cst_120 = arith.constant dense<0.000000e+00> : vector<2x8x16xf32>
    %236 = tpu.matmul %231, %233, %cst_120 {dimension_numbers = #tpu.dot_dimension_numbers<[2], [2], [1], [1], [0, 0, 0, 1, 1, 1], [0], [0]>} : vector<2x8x16xf32>, vector<2x16x16xf32>, vector<2x8x16xf32> -> vector<2x8x16xf32>
    "tpu.trace_stop"() : () -> ()
    %cst_121 = arith.constant dense<0xFF800000> : vector<2x8xf32>
    %237 = vector.multi_reduction <maximumf>, %236, %cst_121 [2] : vector<2x8x16xf32> to vector<2x8xf32>
    %238 = vector.shape_cast %237 : vector<2x8xf32> to vector<2x8x1xf32>
    %239 = vector.broadcast %238 : vector<2x8x1xf32> to vector<2x8x16xf32>
    %240 = arith.subf %236, %239 : vector<2x8x16xf32>
    %241 = math.exp %240 : vector<2x8x16xf32>
    %cst_122 = arith.constant dense<0.000000e+00> : vector<2x8xf32>
    %242 = vector.multi_reduction <add>, %241, %cst_122 [2] : vector<2x8x16xf32> to vector<2x8xf32>
    %243 = vector.shape_cast %242 : vector<2x8xf32> to vector<2x8x1xf32>
    %244 = tpu.reciprocal %243 {approx = true} : vector<2x8x1xf32> -> vector<2x8x1xf32>
    %245 = vector.broadcast %244 : vector<2x8x1xf32> to vector<2x8x16xf32>
    %246 = arith.mulf %241, %245 : vector<2x8x16xf32>
    "tpu.trace_start"() <{level = 10 : i32, message = "bnm,bmd->bnd"}> : () -> ()
    %cst_123 = arith.constant dense<0.000000e+00> : vector<2x8x16xf32>
    %247 = tpu.matmul %246, %235, %cst_123 {dimension_numbers = #tpu.dot_dimension_numbers<[2], [1], [1], [2], [0, 0, 0, 1, 1, 2], [0], [0]>} : vector<2x8x16xf32>, vector<2x16x16xf32>, vector<2x8x16xf32> -> vector<2x8x16xf32>
    "tpu.trace_stop"() : () -> ()
    %248 = vector.shape_cast %247 : vector<2x8x16xf32> to vector<16x16xf32>
    %c1_124 = arith.constant 1 : index
    %c0_125 = arith.constant 0 : index
    %c0_126 = arith.constant 0 : index
    %c0_127 = arith.constant 0 : index
    %249 = vector.load %arg9[%c1_124, %c0_125, %c0_126, %c0_127] : memref<2x2x16x32xf32, #tpu.memory_space<vmem>>, vector<1x1x16x32xf32>
    %250 = vector.shape_cast %249 : vector<1x1x16x32xf32> to vector<16x32xf32>
    %cst_128 = arith.constant dense<0.000000e+00> : vector<16x32xf32>
    %251 = tpu.matmul %248, %250, %cst_128 {dimension_numbers = #tpu.dot_dimension_numbers<[1], [0], [0], [1], [0, 0, 1, 1], [], []>} : vector<16x16xf32>, vector<16x32xf32>, vector<16x32xf32> -> vector<16x32xf32>
    %252 = vector.extract_strided_slice %223 {offsets = [0, 16], sizes = [16, 16], strides = [1, 1]} : vector<16x32xf32> to vector<16x16xf32>
    %253 = vector.shape_cast %252 : vector<16x16xf32> to vector<2x8x16xf32>
    %254 = vector.extract_strided_slice %226 {offsets = [0, 16], sizes = [32, 16], strides = [1, 1]} : vector<32x32xf32> to vector<32x16xf32>
    %255 = vector.shape_cast %254 : vector<32x16xf32> to vector<2x16x16xf32>
    %256 = vector.extract_strided_slice %229 {offsets = [0, 16], sizes = [32, 16], strides = [1, 1]} : vector<32x32xf32> to vector<32x16xf32>
    %257 = vector.shape_cast %256 : vector<32x16xf32> to vector<2x16x16xf32>
    "tpu.trace_start"() <{level = 10 : i32, message = "bnd,bmd->bnm"}> : () -> ()
    %cst_129 = arith.constant dense<0.000000e+00> : vector<2x8x16xf32>
    %258 = tpu.matmul %253, %255, %cst_129 {dimension_numbers = #tpu.dot_dimension_numbers<[2], [2], [1], [1], [0, 0, 0, 1, 1, 1], [0], [0]>} : vector<2x8x16xf32>, vector<2x16x16xf32>, vector<2x8x16xf32> -> vector<2x8x16xf32>
    "tpu.trace_stop"() : () -> ()
    %cst_130 = arith.constant dense<0xFF800000> : vector<2x8xf32>
    %259 = vector.multi_reduction <maximumf>, %258, %cst_130 [2] : vector<2x8x16xf32> to vector<2x8xf32>
    %260 = vector.shape_cast %259 : vector<2x8xf32> to vector<2x8x1xf32>
    %261 = vector.broadcast %260 : vector<2x8x1xf32> to vector<2x8x16xf32>
    %262 = arith.subf %258, %261 : vector<2x8x16xf32>
    %263 = math.exp %262 : vector<2x8x16xf32>
    %cst_131 = arith.constant dense<0.000000e+00> : vector<2x8xf32>
    %264 = vector.multi_reduction <add>, %263, %cst_131 [2] : vector<2x8x16xf32> to vector<2x8xf32>
    %265 = vector.shape_cast %264 : vector<2x8xf32> to vector<2x8x1xf32>
    %266 = tpu.reciprocal %265 {approx = true} : vector<2x8x1xf32> -> vector<2x8x1xf32>
    %267 = vector.broadcast %266 : vector<2x8x1xf32> to vector<2x8x16xf32>
    %268 = arith.mulf %263, %267 : vector<2x8x16xf32>
    "tpu.trace_start"() <{level = 10 : i32, message = "bnm,bmd->bnd"}> : () -> ()
    %cst_132 = arith.constant dense<0.000000e+00> : vector<2x8x16xf32>
    %269 = tpu.matmul %268, %257, %cst_132 {dimension_numbers = #tpu.dot_dimension_numbers<[2], [1], [1], [2], [0, 0, 0, 1, 1, 2], [0], [0]>} : vector<2x8x16xf32>, vector<2x16x16xf32>, vector<2x8x16xf32> -> vector<2x8x16xf32>
    "tpu.trace_stop"() : () -> ()
    %270 = vector.shape_cast %269 : vector<2x8x16xf32> to vector<16x16xf32>
    %c1_133 = arith.constant 1 : index
    %c1_134 = arith.constant 1 : index
    %c0_135 = arith.constant 0 : index
    %c0_136 = arith.constant 0 : index
    %271 = vector.load %arg9[%c1_133, %c1_134, %c0_135, %c0_136] : memref<2x2x16x32xf32, #tpu.memory_space<vmem>>, vector<1x1x16x32xf32>
    %272 = vector.shape_cast %271 : vector<1x1x16x32xf32> to vector<16x32xf32>
    %cst_137 = arith.constant dense<0.000000e+00> : vector<16x32xf32>
    %273 = tpu.matmul %270, %272, %cst_137 {dimension_numbers = #tpu.dot_dimension_numbers<[1], [0], [0], [1], [0, 0, 1, 1], [], []>} : vector<16x16xf32>, vector<16x32xf32>, vector<16x32xf32> -> vector<16x32xf32>
    %274 = arith.addf %251, %273 : vector<16x32xf32>
    %275 = arith.addf %166, %274 : vector<16x32xf32>
    %c1_138 = arith.constant 1 : index
    %c0_139 = arith.constant 0 : index
    %c0_140 = arith.constant 0 : index
    %276 = vector.load %arg10[%c1_138, %c0_139, %c0_140] : memref<2x1x32xf32, #tpu.memory_space<vmem>>, vector<1x1x32xf32>
    %277 = vector.shape_cast %276 : vector<1x1x32xf32> to vector<1x32xf32>
    %278 = vector.broadcast %277 : vector<1x32xf32> to vector<16x32xf32>
    %279 = arith.addf %275, %278 : vector<16x32xf32>
    %c1_141 = arith.constant 1 : index
    %c0_142 = arith.constant 0 : index
    %c0_143 = arith.constant 0 : index
    %280 = vector.load %arg11[%c1_141, %c0_142, %c0_143] : memref<2x1x32xf32, #tpu.memory_space<vmem>>, vector<1x1x32xf32>
    %281 = vector.shape_cast %280 : vector<1x1x32xf32> to vector<1x32xf32>
    %c1_144 = arith.constant 1 : index
    %c0_145 = arith.constant 0 : index
    %c0_146 = arith.constant 0 : index
    %282 = vector.load %arg12[%c1_144, %c0_145, %c0_146] : memref<2x1x32xf32, #tpu.memory_space<vmem>>, vector<1x1x32xf32>
    %283 = vector.shape_cast %282 : vector<1x1x32xf32> to vector<1x32xf32>
    %cst_147 = arith.constant dense<0.000000e+00> : vector<16xf32>
    %284 = vector.multi_reduction <add>, %279, %cst_147 [1] : vector<16x32xf32> to vector<16xf32>
    %285 = vector.shape_cast %284 : vector<16xf32> to vector<16x1xf32>
    %cst_148 = arith.constant 3.200000e+01 : f32
    %286 = vector.broadcast %cst_148 : f32 to vector<16x1xf32>
    %287 = arith.divf %285, %286 : vector<16x1xf32>
    %288 = vector.broadcast %287 : vector<16x1xf32> to vector<16x32xf32>
    %289 = arith.subf %279, %288 : vector<16x32xf32>
    %290 = arith.mulf %289, %289 : vector<16x32xf32>
    %cst_149 = arith.constant dense<0.000000e+00> : vector<16xf32>
    %291 = vector.multi_reduction <add>, %290, %cst_149 [1] : vector<16x32xf32> to vector<16xf32>
    %292 = vector.shape_cast %291 : vector<16xf32> to vector<16x1xf32>
    %cst_150 = arith.constant 3.200000e+01 : f32
    %293 = vector.broadcast %cst_150 : f32 to vector<16x1xf32>
    %294 = arith.divf %292, %293 : vector<16x1xf32>
    %295 = vector.broadcast %287 : vector<16x1xf32> to vector<16x32xf32>
    %296 = arith.subf %279, %295 : vector<16x32xf32>
    %cst_151 = arith.constant 9.99999974E-6 : f32
    %297 = vector.broadcast %cst_151 : f32 to vector<16x1xf32>
    %298 = arith.addf %294, %297 : vector<16x1xf32>
    %299 = math.rsqrt %298 : vector<16x1xf32>
    %300 = vector.broadcast %299 : vector<16x1xf32> to vector<16x32xf32>
    %301 = arith.mulf %296, %300 : vector<16x32xf32>
    %302 = vector.broadcast %281 : vector<1x32xf32> to vector<16x32xf32>
    %303 = arith.mulf %301, %302 : vector<16x32xf32>
    %304 = vector.broadcast %283 : vector<1x32xf32> to vector<16x32xf32>
    %305 = arith.addf %303, %304 : vector<16x32xf32>
    %c1_152 = arith.constant 1 : index
    %c0_153 = arith.constant 0 : index
    %c0_154 = arith.constant 0 : index
    %306 = vector.load %arg13[%c1_152, %c0_153, %c0_154] : memref<2x32x256xf32, #tpu.memory_space<vmem>>, vector<1x32x256xf32>
    %307 = vector.shape_cast %306 : vector<1x32x256xf32> to vector<32x256xf32>
    %cst_155 = arith.constant dense<0.000000e+00> : vector<16x256xf32>
    %308 = tpu.matmul %305, %307, %cst_155 {dimension_numbers = #tpu.dot_dimension_numbers<[1], [0], [0], [1], [0, 0, 1, 1], [], []>} : vector<16x32xf32>, vector<32x256xf32>, vector<16x256xf32> -> vector<16x256xf32>
    %c1_156 = arith.constant 1 : index
    %c0_157 = arith.constant 0 : index
    %c0_158 = arith.constant 0 : index
    %309 = vector.load %arg14[%c1_156, %c0_157, %c0_158] : memref<2x1x256xf32, #tpu.memory_space<vmem>>, vector<1x1x256xf32>
    %310 = vector.shape_cast %309 : vector<1x1x256xf32> to vector<1x256xf32>
    %311 = vector.broadcast %310 : vector<1x256xf32> to vector<16x256xf32>
    %312 = arith.addf %308, %311 : vector<16x256xf32>
    %313 = vector.extract_strided_slice %312 {offsets = [0, 0], sizes = [16, 128], strides = [1, 1]} : vector<16x256xf32> to vector<16x128xf32>
    %314 = vector.extract_strided_slice %312 {offsets = [0, 128], sizes = [16, 128], strides = [1, 1]} : vector<16x256xf32> to vector<16x128xf32>
    %cst_159 = arith.constant 5.000000e-01 : f32
    %315 = vector.broadcast %cst_159 : f32 to vector<16x128xf32>
    %316 = arith.mulf %315, %314 : vector<16x128xf32>
    %cst_160 = arith.constant 0.707106769 : f32
    %317 = vector.broadcast %cst_160 : f32 to vector<16x128xf32>
    %318 = arith.mulf %314, %317 : vector<16x128xf32>
    %319 = math.erf %318 : vector<16x128xf32>
    %cst_161 = arith.constant 1.000000e+00 : f32
    %320 = vector.broadcast %cst_161 : f32 to vector<16x128xf32>
    %321 = arith.addf %320, %319 : vector<16x128xf32>
    %322 = arith.mulf %316, %321 : vector<16x128xf32>
    %323 = arith.mulf %313, %322 : vector<16x128xf32>
    %c1_162 = arith.constant 1 : index
    %c0_163 = arith.constant 0 : index
    %c0_164 = arith.constant 0 : index
    %324 = vector.load %arg15[%c1_162, %c0_163, %c0_164] : memref<2x128x32xf32, #tpu.memory_space<vmem>>, vector<1x128x32xf32>
    %325 = vector.shape_cast %324 : vector<1x128x32xf32> to vector<128x32xf32>
    %cst_165 = arith.constant dense<0.000000e+00> : vector<16x32xf32>
    %326 = tpu.matmul %323, %325, %cst_165 {dimension_numbers = #tpu.dot_dimension_numbers<[1], [0], [0], [1], [0, 0, 1, 1], [], []>} : vector<16x128xf32>, vector<128x32xf32>, vector<16x32xf32> -> vector<16x32xf32>
    %c1_166 = arith.constant 1 : index
    %c0_167 = arith.constant 0 : index
    %c0_168 = arith.constant 0 : index
    %327 = vector.load %arg16[%c1_166, %c0_167, %c0_168] : memref<2x1x32xf32, #tpu.memory_space<vmem>>, vector<1x1x32xf32>
    %328 = vector.shape_cast %327 : vector<1x1x32xf32> to vector<1x32xf32>
    %329 = vector.broadcast %328 : vector<1x32xf32> to vector<16x32xf32>
    %330 = arith.addf %326, %329 : vector<16x32xf32>
    %331 = arith.addf %279, %330 : vector<16x32xf32>
    %c0_169 = arith.constant 0 : index
    %c0_170 = arith.constant 0 : index
    %332 = vector.load %arg17[%c0_169, %c0_170] : memref<16x32xf32, #tpu.memory_space<vmem>>, vector<16x32xf32>
    tpu.vector_store %arg17[%c0_169, %c0_170], %331 {strides = array<i32>} : memref<16x32xf32, #tpu.memory_space<vmem>>, vector<16x32xf32>,
    return
  }
}

</mosaic_0001>

<llo_original>
// kernel: tpu_custom_call.1
$region0: #{tpu_custom_call.1}
  #allocation0 [shape = 'u32[]', space=smem, size = 0x4, offset = 0x4, fixed_abs, tag = 'smem constant byte address 0x4 - core index']
  #allocation1 [shape = 'u32[72,128]{1,0:T(1,128)}', space=vmem, size = 0x9000, scoped, tag = 'internal scratch']
  %s0 = inlined_call_operand.vmem [shape: f32[16,32], index: 0, kind: input, shape index: {}]
  %s1 = inlined_call_operand.vmem [shape: f32[32,16], index: 1, kind: input, shape index: {}]
  %s2 = inlined_call_operand.vmem [shape: f32[2,1,32], index: 2, kind: input, shape index: {}]
  %s3 = inlined_call_operand.vmem [shape: f32[2,1,32], index: 3, kind: input, shape index: {}]
  %s4 = inlined_call_operand.vmem [shape: f32[2,1,16], index: 4, kind: input, shape index: {}]
  %s5 = inlined_call_operand.vmem [shape: f32[2,1,16], index: 5, kind: input, shape index: {}]
  %s6 = inlined_call_operand.vmem [shape: f32[2,32,32], index: 6, kind: input, shape index: {}]
  %s7 = inlined_call_operand.vmem [shape: f32[2,16,32], index: 7, kind: input, shape index: {}]
  %s8 = inlined_call_operand.vmem [shape: f32[2,16,32], index: 8, kind: input, shape index: {}]
  %s9 = inlined_call_operand.vmem [shape: f32[2,2,16,32], index: 9, kind: input, shape index: {}]
  %s10 = inlined_call_operand.vmem [shape: f32[2,1,32], index: 10, kind: input, shape index: {}]
  %s11 = inlined_call_operand.vmem [shape: f32[2,1,32], index: 11, kind: input, shape index: {}]
  %s12 = inlined_call_operand.vmem [shape: f32[2,1,32], index: 12, kind: input, shape index: {}]
  %s13 = inlined_call_operand.vmem [shape: f32[2,32,256], index: 13, kind: input, shape index: {}]
  %s14 = inlined_call_operand.vmem [shape: f32[2,1,256], index: 14, kind: input, shape index: {}]
  %s15 = inlined_call_operand.vmem [shape: f32[2,128,32], index: 15, kind: input, shape index: {}]
  %s16 = inlined_call_operand.vmem [shape: f32[2,1,32], index: 16, kind: input, shape index: {}]
  %s17 = inlined_call_operand.hbm [shape: f32[16,32], index: 17, kind: output, shape index: {}]
  %s18 = sld [smem:[#allocation0]]
  $region78: #{tpu_custom_call.1} parent=0
    _
  %s20 = ssub.s32 1, %s18
  %s21 = scalar_select 0, %s20, %s18
  $region1: #{tpu_custom_call.1} parent=0
    #allocation2 [shape = 'u8[8192]{0}', space=vmem, size = 0x2000, scoped, tag = 'output window, operand 0, single buffered']
    #allocation3 [shape = 's32[1]{0}', space=sflag, size = 0x4, scoped, tag = 'scoped memory for tpu_custom_call.1']
    %22 = vsyncpa [#allocation3], 0
    // Predicated region
    $region2: #{tpu_custom_call.1} parent=1 // pred_check
      _
    $region3: #{tpu_custom_call.1} parent=1 // pred_check_branch
      %24 = sbr.rel (0) target = $region5
    $region4: #{tpu_custom_call.1} parent=1 // pred_region
      _
    $region5: #{tpu_custom_call.1} parent=1 // pred_fallthru
      _
    // Predicated region
    $region6: #{tpu_custom_call.1} parent=1 // pred_check
      _
    $region7: #{tpu_custom_call.1} parent=1 // pred_check_branch
      %26 = sbr.rel (0) target = $region9
    $region8: #{tpu_custom_call.1} parent=1 // pred_region
      _
    $region9: #{tpu_custom_call.1} parent=1 // pred_fallthru
      _
    // Predicated region
    $region10: #{tpu_custom_call.1} parent=1 // pred_check
      _
    $region11: #{tpu_custom_call.1} parent=1 // pred_check_branch
      %28 = sbr.rel (0) target = $region13
    $region12: #{tpu_custom_call.1} parent=1 // pred_region
      _
    $region13: #{tpu_custom_call.1} parent=1 // pred_fallthru
      _
    // Predicated region
    $region14: #{tpu_custom_call.1} parent=1 // pred_check
      _
    $region15: #{tpu_custom_call.1} parent=1 // pred_check_branch
      %30 = sbr.rel (0) target = $region17
    $region16: #{tpu_custom_call.1} parent=1 // pred_region
      _
    $region17: #{tpu_custom_call.1} parent=1 // pred_fallthru
      _
    // Predicated region
    $region18: #{tpu_custom_call.1} parent=1 // pred_check
      _
    $region19: #{tpu_custom_call.1} parent=1 // pred_check_branch
      %32 = sbr.rel (0) target = $region21
    $region20: #{tpu_custom_call.1} parent=1 // pred_region
      _
    $region21: #{tpu_custom_call.1} parent=1 // pred_fallthru
      _
    // Predicated region
    $region22: #{tpu_custom_call.1} parent=1 // pred_check
      _
    $region23: #{tpu_custom_call.1} parent=1 // pred_check_branch
      %34 = sbr.rel (0) target = $region25
    $region24: #{tpu_custom_call.1} parent=1 // pred_region
      _
    $region25: #{tpu_custom_call.1} parent=1 // pred_fallthru
      _
    // Predicated region
    $region26: #{tpu_custom_call.1} parent=1 // pred_check
      _
    $region27: #{tpu_custom_call.1} parent=1 // pred_check_branch
      %36 = sbr.rel (0) target = $region29
    $region28: #{tpu_custom_call.1} parent=1 // pred_region
      _
    $region29: #{tpu_custom_call.1} parent=1 // pred_fallthru
      _
    // Predicated region
    $region30: #{tpu_custom_call.1} parent=1 // pred_check
      _
    $region31: #{tpu_custom_call.1} parent=1 // pred_check_branch
      %38 = sbr.rel (0) target = $region33
    $region32: #{tpu_custom_call.1} parent=1 // pred_region
      _
    $region33: #{tpu_custom_call.1} parent=1 // pred_fallthru
      _
    // Predicated region
    $region34: #{tpu_custom_call.1} parent=1 // pred_check
      _
    $region35: #{tpu_custom_call.1} parent=1 // pred_check_branch
      %40 = sbr.rel (0) target = $region37
    $region36: #{tpu_custom_call.1} parent=1 // pred_region
      _
    $region37: #{tpu_custom_call.1} parent=1 // pred_fallthru
      _
    // Predicated region
    $region38: #{tpu_custom_call.1} parent=1 // pred_check
      _
    $region39: #{tpu_custom_call.1} parent=1 // pred_check_branch
      %42 = sbr.rel (0) target = $region41
    $region40: #{tpu_custom_call.1} parent=1 // pred_region
      _
    $region41: #{tpu_custom_call.1} parent=1 // pred_fallthru
      _
    // Predicated region
    $region42: #{tpu_custom_call.1} parent=1 // pred_check
      _
    $region43: #{tpu_custom_call.1} parent=1 // pred_check_branch
      %44 = sbr.rel (0) target = $region45
    $region44: #{tpu_custom_call.1} parent=1 // pred_region
      _
    $region45: #{tpu_custom_call.1} parent=1 // pred_fallthru
      _
    // Predicated region
    $region46: #{tpu_custom_call.1} parent=1 // pred_check
      _
    $region47: #{tpu_custom_call.1} parent=1 // pred_check_branch
      %46 = sbr.rel (0) target = $region49
    $region48: #{tpu_custom_call.1} parent=1 // pred_region
      _
    $region49: #{tpu_custom_call.1} parent=1 // pred_fallthru
      _
    // Predicated region
    $region50: #{tpu_custom_call.1} parent=1 // pred_check
      _
    $region51: #{tpu_custom_call.1} parent=1 // pred_check_branch
      %48 = sbr.rel (0) target = $region53
    $region52: #{tpu_custom_call.1} parent=1 // pred_region
      _
    $region53: #{tpu_custom_call.1} parent=1 // pred_fallthru
      _
    // Predicated region
    $region54: #{tpu_custom_call.1} parent=1 // pred_check
      _
    $region55: #{tpu_custom_call.1} parent=1 // pred_check_branch
      %50 = sbr.rel (0) target = $region57
    $region56: #{tpu_custom_call.1} parent=1 // pred_region
      _
    $region57: #{tpu_custom_call.1} parent=1 // pred_fallthru
      _
    // Predicated region
    $region58: #{tpu_custom_call.1} parent=1 // pred_check
      _
    $region59: #{tpu_custom_call.1} parent=1 // pred_check_branch
      %52 = sbr.rel (0) target = $region61
    $region60: #{tpu_custom_call.1} parent=1 // pred_region
      _
    $region61: #{tpu_custom_call.1} parent=1 // pred_fallthru
      _
    // Predicated region
    $region62: #{tpu_custom_call.1} parent=1 // pred_check
      _
    $region63: #{tpu_custom_call.1} parent=1 // pred_check_branch
      %54 = sbr.rel (0) target = $region65
    $region64: #{tpu_custom_call.1} parent=1 // pred_region
      _
    $region65: #{tpu_custom_call.1} parent=1 // pred_fallthru
      _
    // Predicated region
    $region66: #{tpu_custom_call.1} parent=1 // pred_check
      _
    $region67: #{tpu_custom_call.1} parent=1 // pred_check_branch
      %56 = sbr.rel (0) target = $region69
    $region68: #{tpu_custom_call.1} parent=1 // pred_region
      _
    $region69: #{tpu_custom_call.1} parent=1 // pred_fallthru
      _
    %v57 = vld [vmem:[%s0] sm:$0xff]
    %v58 = vld [vmem:[%s0 + $0x8] sm:$0xff]
    %v59 = vld [vmem:[%s1] sm:$0xff]
    %v60 = vld [vmem:[%s1 + $0x8] sm:$0xff]
    %v61 = vld [vmem:[%s1 + $0x10] sm:$0xff]
    %v62 = vld [vmem:[%s1 + $0x18] sm:$0xff]
    %v63 = vld [vmem:[%s2] sm:$0x1]
    %v64 = vld [vmem:[%s3] sm:$0x1]
    %vm65 = vcmask 261120
    %v66 = vsel %vm65, %v57, 0.0
    %67 = vadd.xlane.f32.xlu0 %v66
    %v68 = vpop.xlane.xlu0 %67
    %v69 = vsel %vm65, %v58, 0.0
    %70 = vadd.xlane.f32.xlu0 %v69
    %v71 = vpop.xlane.xlu0 %70
    %v72 = vrcp.pop 32.0
    %v73 = vmul.f32 32.0, %v72
    %v74 = vsub.f32 1.0, %v73
    %v75 = vmul.f32 %v72, %v74
    %v76 = vadd.f32 %v72, %v75
    %vm77 = vweird.f32 %v72
    %v78 = vsel %vm77, %v72, %v76
    %v79 = vmul.f32 %v68, %v78
    %v80 = vmul.f32 %v71, %v78
    %v81 = vsub.f32 %v57, %v79
    %v82 = vsub.f32 %v58, %v80
    %v83 = vmul.f32 %v81, %v81
    %v84 = vmul.f32 %v82, %v82
    %v85 = vsel %vm65, %v83, 0.0
    %86 = vadd.xlane.f32.xlu0 %v85
    %v87 = vpop.xlane.xlu0 %86
    %v88 = vsel %vm65, %v84, 0.0
    %89 = vadd.xlane.f32.xlu0 %v88
    %v90 = vpop.xlane.xlu0 %89
    %v91 = vmul.f32 %v87, %v78
    %v92 = vmul.f32 %v90, %v78
    %v93 = vadd.f32 %v91, 1e-05
    %v94 = vadd.f32 %v92, 1e-05
    %v95 = vrsqrt.pop %v93
    %v96 = vmul.f32 %v95, %v93
    %v97 = vmul.f32 %v96, %v95
    %v98 = vmul.f32 0.5, %v97
    %v99 = vsub.f32 1.5, %v98
    %v100 = vmul.f32 %v95, %v99
    %vm101 = vweird.f32 %v93
    %vm102 = vweird.f32 %v95
    %vm103 = vmor %vm101, %vm102
    %v104 = vsel %vm103, %v95, %v100
    %v105 = vrsqrt.pop %v94
    %v106 = vmul.f32 %v105, %v94
    %v107 = vmul.f32 %v106, %v105
    %v108 = vmul.f32 0.5, %v107
    %v109 = vsub.f32 1.5, %v108
    %v110 = vmul.f32 %v105, %v109
    %vm111 = vweird.f32 %v94
    %vm112 = vweird.f32 %v105
    %vm113 = vmor %vm111, %vm112
    %v114 = vsel %vm113, %v105, %v110
    %v115 = vmul.f32 %v81, %v104
    %v116 = vmul.f32 %v82, %v114
    %v118 = vperm.slane %v63, 0
    %v120 = vmul.f32 %v115, %v118
    %v121 = vmul.f32 %v116, %v118
    %v123 = vperm.slane %v64, 0
    %v125 = vadd.f32 %v120, %v123
    %v126 = vadd.f32 %v121, %v123
    %v127 = vld [vmem:[%s4] sm:$0x1]
    %v128 = vld [vmem:[%s5] sm:$0x1]
    %vm129 = vcmask 130048
    %v130 = vsel %vm129, %v59, 0.0
    %131 = vadd.xlane.f32.xlu0 %v130
    %v132 = vpop.xlane.xlu0 %131
    %v133 = vsel %vm129, %v60, 0.0
    %134 = vadd.xlane.f32.xlu0 %v133
    %v135 = vpop.xlane.xlu0 %134
    %v136 = vsel %vm129, %v61, 0.0
    %137 = vadd.xlane.f32.xlu0 %v136
    %v138 = vpop.xlane.xlu0 %137
    %v139 = vsel %vm129, %v62, 0.0
    %140 = vadd.xlane.f32.xlu0 %v139
    %v141 = vpop.xlane.xlu0 %140
    %v142 = vrcp.pop 16.0
    %v143 = vmul.f32 16.0, %v142
    %v144 = vsub.f32 1.0, %v143
    %v145 = vmul.f32 %v142, %v144
    %v146 = vadd.f32 %v142, %v145
    %vm147 = vweird.f32 %v142
    %v148 = vsel %vm147, %v142, %v146
    %v149 = vmul.f32 %v132, %v148
    %v150 = vmul.f32 %v135, %v148
    %v151 = vmul.f32 %v138, %v148
    %v152 = vmul.f32 %v141, %v148
    %v153 = vsub.f32 %v59, %v149
    %v154 = vsub.f32 %v60, %v150
    %v155 = vsub.f32 %v61, %v151
    %v156 = vsub.f32 %v62, %v152
    %v157 = vmul.f32 %v153, %v153
    %v158 = vmul.f32 %v154, %v154
    %v159 = vmul.f32 %v155, %v155
    %v160 = vmul.f32 %v156, %v156
    %v161 = vsel %vm129, %v157, 0.0
    %162 = vadd.xlane.f32.xlu0 %v161
    %v163 = vpop.xlane.xlu0 %162
    %v164 = vsel %vm129, %v158, 0.0
    %165 = vadd.xlane.f32.xlu0 %v164
    %v166 = vpop.xlane.xlu0 %165
    %v167 = vsel %vm129, %v159, 0.0
    %168 = vadd.xlane.f32.xlu0 %v167
    %v169 = vpop.xlane.xlu0 %168
    %v170 = vsel %vm129, %v160, 0.0
    %171 = vadd.xlane.f32.xlu0 %v170
    %v172 = vpop.xlane.xlu0 %171
    %v173 = vmul.f32 %v163, %v148
    %v174 = vmul.f32 %v166, %v148
    %v175 = vmul.f32 %v169, %v148
    %v176 = vmul.f32 %v172, %v148
    %v177 = vadd.f32 %v173, 1e-05
    %v178 = vadd.f32 %v174, 1e-05
    %v179 = vadd.f32 %v175, 1e-05
    %v180 = vadd.f32 %v176, 1e-05
    %v181 = vrsqrt.pop %v177
    %v182 = vmul.f32 %v181, %v177
    %v183 = vmul.f32 %v182, %v181
    %v184 = vmul.f32 0.5, %v183
    %v185 = vsub.f32 1.5, %v184
    %v186 = vmul.f32 %v181, %v185
    %vm187 = vweird.f32 %v177
    %vm188 = vweird.f32 %v181
    %vm189 = vmor %vm187, %vm188
    %v190 = vsel %vm189, %v181, %v186
    %v191 = vrsqrt.pop %v178
    %v192 = vmul.f32 %v191, %v178
    %v193 = vmul.f32 %v192, %v191
    %v194 = vmul.f32 0.5, %v193
    %v195 = vsub.f32 1.5, %v194
    %v196 = vmul.f32 %v191, %v195
    %vm197 = vweird.f32 %v178
    %vm198 = vweird.f32 %v191
    %vm199 = vmor %vm197, %vm198
    %v200 = vsel %vm199, %v191, %v196
    %v201 = vrsqrt.pop %v179
    %v202 = vmul.f32 %v201, %v179
    %v203 = vmul.f32 %v202, %v201
    %v204 = vmul.f32 0.5, %v203
    %v205 = vsub.f32 1.5, %v204
    %v206 = vmul.f32 %v201, %v205
    %vm207 = vweird.f32 %v179
    %vm208 = vweird.f32 %v201
    %vm209 = vmor %vm207, %vm208
    %v210 = vsel %vm209, %v201, %v206
    %v211 = vrsqrt.pop %v180
    %v212 = vmul.f32 %v211, %v180
    %v213 = vmul.f32 %v212, %v211
    %v214 = vmul.f32 0.5, %v213
    %v215 = vsub.f32 1.5, %v214
    %v216 = vmul.f32 %v211, %v215
    %vm217 = vweird.f32 %v180
    %vm218 = vweird.f32 %v211
    %vm219 = vmor %vm217, %vm218
    %v220 = vsel %vm219, %v211, %v216
    %v221 = vmul.f32 %v153, %v190
    %v222 = vmul.f32 %v154, %v200
    %v223 = vmul.f32 %v155, %v210
    %v224 = vmul.f32 %v156, %v220
    %v226 = vperm.slane %v127, 0
    %v228 = vmul.f32 %v221, %v226
    %v229 = vmul.f32 %v222, %v226
    %v230 = vmul.f32 %v223, %v226
    %v231 = vmul.f32 %v224, %v226
    %v233 = vperm.slane %v128, 0
    %v235 = vadd.f32 %v228, %v233
    %v236 = vadd.f32 %v229, %v233
    %v237 = vadd.f32 %v230, %v233
    %v238 = vadd.f32 %v231, %v233
    %v239 = vld [vmem:[%s6] sm:$0xff]
    %v240 = vld [vmem:[%s6 + $0x8] sm:$0xff]
    %v241 = vld [vmem:[%s6 + $0x10] sm:$0xff]
    %v242 = vld [vmem:[%s6 + $0x18] sm:$0xff]
    %v244 = vsel %vm65, %v125, 0
    %v247 = vsel %vm65, %v126, 0
    %249 = vmatpush.msra.mxu0 0.0
    %250 = vmatpush.msra.mxu0 0.0
    %251 = vmatpush.msra.mxu0 0.0
    %252 = vmatpush.msra.mxu0 0.0
    %253 = vmatpush.msra.mxu0 0.0
    %254 = vmatpush.msra.mxu0 0.0
    %255 = vmatpush.msra.mxu0 0.0
    %256 = vmatpush.msra.mxu0 0.0
    %257 = vmatpush.msra.mxu0 0.0
    %258 = vmatpush.msra.mxu0 0.0
    %259 = vmatpush.msra.mxu0 0.0
    %260 = vmatpush.msra.mxu0 0.0
    %261 = vmatpush.msra.mxu0 %v242
    %262 = vmatpush.msra.mxu0 %v241
    %263 = vmatpush.msra.mxu0 %v240
    %264 = vmatpush.msra.mxu0 %v239
    %265 = vmatmul.f32.gmra.mxu0 %v244
    %v266 = vpop.f32.mrf.mxu0
    %v267 = vadd.f32 0.0, %v266
    %268 = vmatmul.f32.gmra.mxu0 %v247
    %v269 = vpop.f32.mrf.mxu0
    %v270 = vadd.f32 0.0, %v269
    %271 = vdwg.mxu0
    %v272 = vmul.f32 %v267, 0.25
    %v273 = vmul.f32 %v270, 0.25
    %v274 = vld [vmem:[%s7] sm:$0xff]
    %v275 = vld [vmem:[%s7 + $0x8] sm:$0xff]
    %v277 = vsel %vm129, %v235, 0
    %v280 = vsel %vm129, %v236, 0
    %v283 = vsel %vm129, %v237, 0
    %v286 = vsel %vm129, %v238, 0
    %288 = vmatpush.msra.mxu0 0.0
    %289 = vmatpush.msra.mxu0 0.0
    %290 = vmatpush.msra.mxu0 0.0
    %291 = vmatpush.msra.mxu0 0.0
    %292 = vmatpush.msra.mxu0 0.0
    %293 = vmatpush.msra.mxu0 0.0
    %294 = vmatpush.msra.mxu0 0.0
    %295 = vmatpush.msra.mxu0 0.0
    %296 = vmatpush.msra.mxu0 0.0
    %297 = vmatpush.msra.mxu0 0.0
    %298 = vmatpush.msra.mxu0 0.0
    %299 = vmatpush.msra.mxu0 0.0
    %300 = vmatpush.msra.mxu0 0.0
    %301 = vmatpush.msra.mxu0 0.0
    %302 = vmatpush.msra.mxu0 %v275
    %303 = vmatpush.msra.mxu0 %v274
    %304 = vmatmul.f32.gmra.mxu0 %v277
    %v305 = vpop.f32.mrf.mxu0
    %v306 = vadd.f32 0.0, %v305
    %307 = vmatmul.f32.gmra.mxu0 %v280
    %v308 = vpop.f32.mrf.mxu0
    %v309 = vadd.f32 0.0, %v308
    %310 = vmatmul.f32.gmra.mxu0 %v283
    %v311 = vpop.f32.mrf.mxu0
    %v312 = vadd.f32 0.0, %v311
    %313 = vmatmul.f32.gmra.mxu0 %v286
    %v314 = vpop.f32.mrf.mxu0
    %v315 = vadd.f32 0.0, %v314
    %316 = vdwg.mxu0
    %v317 = vld [vmem:[%s8] sm:$0xff]
    %v318 = vld [vmem:[%s8 + $0x8] sm:$0xff]
    %319 = vmatpush.msra.mxu0 0.0
    %320 = vmatpush.msra.mxu0 0.0
    %321 = vmatpush.msra.mxu0 0.0
    %322 = vmatpush.msra.mxu0 0.0
    %323 = vmatpush.msra.mxu0 0.0
    %324 = vmatpush.msra.mxu0 0.0
    %325 = vmatpush.msra.mxu0 0.0
    %326 = vmatpush.msra.mxu0 0.0
    %327 = vmatpush.msra.mxu0 0.0
    %328 = vmatpush.msra.mxu0 0.0
    %329 = vmatpush.msra.mxu0 0.0
    %330 = vmatpush.msra.mxu0 0.0
    %331 = vmatpush.msra.mxu0 0.0
    %332 = vmatpush.msra.mxu0 0.0
    %333 = vmatpush.msra.mxu0 %v318
    %334 = vmatpush.msra.mxu0 %v317
    %335 = vmatmul.f32.gmra.mxu0 %v277
    %v336 = vpop.f32.mrf.mxu0
    %v337 = vadd.f32 0.0, %v336
    %338 = vmatmul.f32.gmra.mxu0 %v280
    %v339 = vpop.f32.mrf.mxu0
    %v340 = vadd.f32 0.0, %v339
    %341 = vmatmul.f32.gmra.mxu0 %v283
    %v342 = vpop.f32.mrf.mxu0
    %v343 = vadd.f32 0.0, %v342
    %344 = vmatmul.f32.gmra.mxu0 %v286
    %v345 = vpop.f32.mrf.mxu0
    %v346 = vadd.f32 0.0, %v345
    %347 = vdwg.mxu0
    %v349 = vsel %vm129, %v272, 0
    %v352 = vsel %vm129, %v306, 0
    %v355 = vsel %vm129, %v309, 0
    %357 = vmatpush.xpose.msra.mxu0 0.0
    %358 = vmatpush.xpose.msra.mxu0 0.0
    %359 = vmatpush.xpose.msra.mxu0 0.0
    %360 = vmatpush.xpose.msra.mxu0 0.0
    %361 = vmatpush.xpose.msra.mxu0 0.0
    %362 = vmatpush.xpose.msra.mxu0 0.0
    %363 = vmatpush.xpose.msra.mxu0 0.0
    %364 = vmatpush.xpose.msra.mxu0 0.0
    %365 = vmatpush.xpose.msra.mxu0 0.0
    %366 = vmatpush.xpose.msra.mxu0 0.0
    %367 = vmatpush.xpose.msra.mxu0 0.0
    %368 = vmatpush.xpose.msra.mxu0 0.0
    %369 = vmatpush.xpose.msra.mxu0 0.0
    %370 = vmatpush.xpose.msra.mxu0 0.0
    %371 = vmatpush.xpose.msra.mxu0 %v355
    %372 = vmatpush.xpose.msra.mxu0 %v352
    %373 = vmatmul.f32.gmra.mxu0 %v349
    %v374 = vpop.f32.mrf.mxu0
    %v375 = vadd.f32 0.0, %v374
    %376 = vdwg.mxu0
    %v378 = vsel %vm129, %v273, 0
    %v381 = vsel %vm129, %v312, 0
    %v384 = vsel %vm129, %v315, 0
    %386 = vmatpush.xpose.msra.mxu0 0.0
    %387 = vmatpush.xpose.msra.mxu0 0.0
    %388 = vmatpush.xpose.msra.mxu0 0.0
    %389 = vmatpush.xpose.msra.mxu0 0.0
    %390 = vmatpush.xpose.msra.mxu0 0.0
    %391 = vmatpush.xpose.msra.mxu0 0.0
    %392 = vmatpush.xpose.msra.mxu0 0.0
    %393 = vmatpush.xpose.msra.mxu0 0.0
    %394 = vmatpush.xpose.msra.mxu0 0.0
    %395 = vmatpush.xpose.msra.mxu0 0.0
    %396 = vmatpush.xpose.msra.mxu0 0.0
    %397 = vmatpush.xpose.msra.mxu0 0.0
    %398 = vmatpush.xpose.msra.mxu0 0.0
    %399 = vmatpush.xpose.msra.mxu0 0.0
    %400 = vmatpush.xpose.msra.mxu0 %v384
    %401 = vmatpush.xpose.msra.mxu0 %v381
    %402 = vmatmul.f32.gmra.mxu0 %v378
    %v403 = vpop.f32.mrf.mxu0
    %v404 = vadd.f32 0.0, %v403
    %405 = vdwg.mxu0
    %v406 = vsel %vm129, %v375, -inf
    %407 = vmax.xlane.f32.xlu0 %v406
    %v408 = vpop.xlane.xlu0 %407
    %v409 = vsel %vm129, %v404, -inf
    %410 = vmax.xlane.f32.xlu0 %v409
    %v411 = vpop.xlane.xlu0 %410
    %v412 = vsub.f32 %v375, %v408
    %v413 = vsub.f32 %v404, %v411
    %v414 = vmul.f32 %v412, 1.442695
    %v415 = vpow.pop %v414
    %v416 = vmul.f32 %v413, 1.442695
    %v417 = vpow.pop %v416
    %v418 = vsel %vm129, %v415, 0.0
    %419 = vadd.xlane.f32.xlu0 %v418
    %v420 = vpop.xlane.xlu0 %419
    %v421 = vsel %vm129, %v417, 0.0
    %422 = vadd.xlane.f32.xlu0 %v421
    %v423 = vpop.xlane.xlu0 %422
    %v424 = vrcp.pop %v420
    %v425 = vrcp.pop %v423
    %v426 = vmul.f32 %v415, %v424
    %v427 = vmul.f32 %v417, %v425
    %v429 = vsel %vm129, %v426, 0
    %431 = vmatpush.msra.mxu0 0.0
    %432 = vmatpush.msra.mxu0 0.0
    %433 = vmatpush.msra.mxu0 0.0
    %434 = vmatpush.msra.mxu0 0.0
    %435 = vmatpush.msra.mxu0 0.0
    %436 = vmatpush.msra.mxu0 0.0
    %437 = vmatpush.msra.mxu0 0.0
    %438 = vmatpush.msra.mxu0 0.0
    %439 = vmatpush.msra.mxu0 0.0
    %440 = vmatpush.msra.mxu0 0.0
    %441 = vmatpush.msra.mxu0 0.0
    %442 = vmatpush.msra.mxu0 0.0
    %443 = vmatpush.msra.mxu0 0.0
    %444 = vmatpush.msra.mxu0 0.0
    %445 = vmatpush.msra.mxu0 %v340
    %446 = vmatpush.msra.mxu0 %v337
    %447 = vmatmul.f32.gmra.mxu0 %v429
    %v448 = vpop.f32.mrf.mxu0
    %v449 = vadd.f32 0.0, %v448
    %450 = vdwg.mxu0
    %v452 = vsel %vm129, %v427, 0
    %454 = vmatpush.msra.mxu0 0.0
    %455 = vmatpush.msra.mxu0 0.0
    %456 = vmatpush.msra.mxu0 0.0
    %457 = vmatpush.msra.mxu0 0.0
    %458 = vmatpush.msra.mxu0 0.0
    %459 = vmatpush.msra.mxu0 0.0
    %460 = vmatpush.msra.mxu0 0.0
    %461 = vmatpush.msra.mxu0 0.0
    %462 = vmatpush.msra.mxu0 0.0
    %463 = vmatpush.msra.mxu0 0.0
    %464 = vmatpush.msra.mxu0 0.0
    %465 = vmatpush.msra.mxu0 0.0
    %466 = vmatpush.msra.mxu0 0.0
    %467 = vmatpush.msra.mxu0 0.0
    %468 = vmatpush.msra.mxu0 %v346
    %469 = vmatpush.msra.mxu0 %v343
    %470 = vmatmul.f32.gmra.mxu0 %v452
    %v471 = vpop.f32.mrf.mxu0
    %v472 = vadd.f32 0.0, %v471
    %473 = vdwg.mxu0
    %v474 = vld [vmem:[%s9] sm:$0xff]
    %v475 = vld [vmem:[%s9 + $0x8] sm:$0xff]
    %476 = vrot.lane.b32.xlu0 %v272, 112
    %v477 = vpop.permute.xlu0 %476
    %478 = vrot.lane.b32.xlu0 %v306, 112
    %v479 = vpop.permute.xlu0 %478
    %480 = vrot.lane.b32.xlu0 %v309, 112
    %v481 = vpop.permute.xlu0 %480
    %v482 = vsel %vm129, %v477, 0
    %v484 = vsel %vm129, %v479, 0
    %v486 = vsel %vm129, %v481, 0
    %488 = vmatpush.xpose.msra.mxu0 0.0
    %489 = vmatpush.xpose.msra.mxu0 0.0
    %490 = vmatpush.xpose.msra.mxu0 0.0
    %491 = vmatpush.xpose.msra.mxu0 0.0
    %492 = vmatpush.xpose.msra.mxu0 0.0
    %493 = vmatpush.xpose.msra.mxu0 0.0
    %494 = vmatpush.xpose.msra.mxu0 0.0
    %495 = vmatpush.xpose.msra.mxu0 0.0
    %496 = vmatpush.xpose.msra.mxu0 0.0
    %497 = vmatpush.xpose.msra.mxu0 0.0
    %498 = vmatpush.xpose.msra.mxu0 0.0
    %499 = vmatpush.xpose.msra.mxu0 0.0
    %500 = vmatpush.xpose.msra.mxu0 0.0
    %501 = vmatpush.xpose.msra.mxu0 0.0
    %502 = vmatpush.xpose.msra.mxu0 %v486
    %503 = vmatpush.xpose.msra.mxu0 %v484
    %504 = vmatmul.f32.gmra.mxu0 %v482
    %v505 = vpop.f32.mrf.mxu0
    %v506 = vadd.f32 0.0, %v505
    %507 = vdwg.mxu0
    %508 = vrot.lane.b32.xlu0 %v273, 112
    %v509 = vpop.permute.xlu0 %508
    %510 = vrot.lane.b32.xlu0 %v312, 112
    %v511 = vpop.permute.xlu0 %510
    %512 = vrot.lane.b32.xlu0 %v315, 112
    %v513 = vpop.permute.xlu0 %512
    %v514 = vsel %vm129, %v509, 0
    %v516 = vsel %vm129, %v511, 0
    %v518 = vsel %vm129, %v513, 0
    %520 = vmatpush.xpose.msra.mxu0 0.0
    %521 = vmatpush.xpose.msra.mxu0 0.0
    %522 = vmatpush.xpose.msra.mxu0 0.0
    %523 = vmatpush.xpose.msra.mxu0 0.0
    %524 = vmatpush.xpose.msra.mxu0 0.0
    %525 = vmatpush.xpose.msra.mxu0 0.0
    %526 = vmatpush.xpose.msra.mxu0 0.0
    %527 = vmatpush.xpose.msra.mxu0 0.0
    %528 = vmatpush.xpose.msra.mxu0 0.0
    %529 = vmatpush.xpose.msra.mxu0 0.0
    %530 = vmatpush.xpose.msra.mxu0 0.0
    %531 = vmatpush.xpose.msra.mxu0 0.0
    %532 = vmatpush.xpose.msra.mxu0 0.0
    %533 = vmatpush.xpose.msra.mxu0 0.0
    %534 = vmatpush.xpose.msra.mxu0 %v518
    %535 = vmatpush.xpose.msra.mxu0 %v516
    %536 = vmatmul.f32.gmra.mxu0 %v514
    %v537 = vpop.f32.mrf.mxu0
    %v538 = vadd.f32 0.0, %v537
    %539 = vdwg.mxu0
    %v540 = vsel %vm129, %v506, -inf
    %541 = vmax.xlane.f32.xlu0 %v540
    %v542 = vpop.xlane.xlu0 %541
    %v543 = vsel %vm129, %v538, -inf
    %544 = vmax.xlane.f32.xlu0 %v543
    %v545 = vpop.xlane.xlu0 %544
    %v546 = vsub.f32 %v506, %v542
    %v547 = vsub.f32 %v538, %v545
    %v548 = vmul.f32 %v546, 1.442695
    %v549 = vpow.pop %v548
    %v550 = vmul.f32 %v547, 1.442695
    %v551 = vpow.pop %v550
    %v552 = vsel %vm129, %v549, 0.0
    %553 = vadd.xlane.f32.xlu0 %v552
    %v554 = vpop.xlane.xlu0 %553
    %v555 = vsel %vm129, %v551, 0.0
    %556 = vadd.xlane.f32.xlu0 %v555
    %v557 = vpop.xlane.xlu0 %556
    %v558 = vrcp.pop %v554
    %v559 = vrcp.pop %v557
    %v560 = vmul.f32 %v549, %v558
    %v561 = vmul.f32 %v551, %v559
    %564 = vrot.lane.b32.xlu0 %v337, 112
    %v565 = vpop.permute.xlu0 %564
    %566 = vrot.lane.b32.xlu0 %v340, 112
    %v567 = vpop.permute.xlu0 %566
    %v571 = vsel %vm129, %v560, 0
    %573 = vmatpush.msra.mxu0 0.0
    %574 = vmatpush.msra.mxu0 0.0
    %575 = vmatpush.msra.mxu0 0.0
    %576 = vmatpush.msra.mxu0 0.0
    %577 = vmatpush.msra.mxu0 0.0
    %578 = vmatpush.msra.mxu0 0.0
    %579 = vmatpush.msra.mxu0 0.0
    %580 = vmatpush.msra.mxu0 0.0
    %581 = vmatpush.msra.mxu0 0.0
    %582 = vmatpush.msra.mxu0 0.0
    %583 = vmatpush.msra.mxu0 0.0
    %584 = vmatpush.msra.mxu0 0.0
    %585 = vmatpush.msra.mxu0 0.0
    %586 = vmatpush.msra.mxu0 0.0
    %587 = vmatpush.msra.mxu0 %v567
    %588 = vmatpush.msra.mxu0 %v565
    %589 = vmatmul.f32.gmra.mxu0 %v571
    %v590 = vpop.f32.mrf.mxu0
    %v591 = vadd.f32 0.0, %v590
    %592 = vdwg.mxu0
    %595 = vrot.lane.b32.xlu0 %v343, 112
    %v596 = vpop.permute.xlu0 %595
    %597 = vrot.lane.b32.xlu0 %v346, 112
    %v598 = vpop.permute.xlu0 %597
    %v602 = vsel %vm129, %v561, 0
    %604 = vmatpush.msra.mxu0 0.0
    %605 = vmatpush.msra.mxu0 0.0
    %606 = vmatpush.msra.mxu0 0.0
    %607 = vmatpush.msra.mxu0 0.0
    %608 = vmatpush.msra.mxu0 0.0
    %609 = vmatpush.msra.mxu0 0.0
    %610 = vmatpush.msra.mxu0 0.0
    %611 = vmatpush.msra.mxu0 0.0
    %612 = vmatpush.msra.mxu0 0.0
    %613 = vmatpush.msra.mxu0 0.0
    %614 = vmatpush.msra.mxu0 0.0
    %615 = vmatpush.msra.mxu0 0.0
    %616 = vmatpush.msra.mxu0 0.0
    %617 = vmatpush.msra.mxu0 0.0
    %618 = vmatpush.msra.mxu0 %v598
    %619 = vmatpush.msra.mxu0 %v596
    %620 = vmatmul.f32.gmra.mxu0 %v602
    %v621 = vpop.f32.mrf.mxu0
    %v622 = vadd.f32 0.0, %v621
    %623 = vdwg.mxu0
    %s624 = scalar_lea.vmem %s9, 16
    %v625 = vld [vmem:[%s624] sm:$0xff]
    %v626 = vld [vmem:[%s624 + $0x8] sm:$0xff]
    %v628 = vsel %vm129, %v591, 0
    %v631 = vsel %vm129, %v622, 0
    %633 = vmatpush.msra.mxu0 0.0
    %634 = vmatpush.msra.mxu0 0.0
    %635 = vmatpush.msra.mxu0 0.0
    %636 = vmatpush.msra.mxu0 0.0
    %637 = vmatpush.msra.mxu0 0.0
    %638 = vmatpush.msra.mxu0 0.0
    %639 = vmatpush.msra.mxu0 0.0
    %640 = vmatpush.msra.mxu0 0.0
    %641 = vmatpush.msra.mxu0 0.0
    %642 = vmatpush.msra.mxu0 0.0
    %643 = vmatpush.msra.mxu0 0.0
    %644 = vmatpush.msra.mxu0 0.0
    %645 = vmatpush.msra.mxu0 0.0
    %646 = vmatpush.msra.mxu0 0.0
    %647 = vmatpush.msra.mxu0 %v626
    %648 = vmatpush.msra.mxu0 %v625
    %649 = vmatmul.f32.gmra.mxu0 %v628
    %v650 = vpop.f32.mrf.mxu0
    %v651 = vadd.f32 0.0, %v650
    %652 = vmatmul.f32.gmra.mxu0 %v631
    %v653 = vpop.f32.mrf.mxu0
    %v654 = vadd.f32 0.0, %v653
    %655 = vdwg.mxu0
    %v657 = vsel %vm129, %v449, 0
    %v660 = vsel %vm129, %v472, 0
    %662 = vmatpush.msra.mxu0 0.0
    %663 = vmatpush.msra.mxu0 0.0
    %664 = vmatpush.msra.mxu0 0.0
    %665 = vmatpush.msra.mxu0 0.0
    %666 = vmatpush.msra.mxu0 0.0
    %667 = vmatpush.msra.mxu0 0.0
    %668 = vmatpush.msra.mxu0 0.0
    %669 = vmatpush.msra.mxu0 0.0
    %670 = vmatpush.msra.mxu0 0.0
    %671 = vmatpush.msra.mxu0 0.0
    %672 = vmatpush.msra.mxu0 0.0
    %673 = vmatpush.msra.mxu0 0.0
    %674 = vmatpush.msra.mxu0 0.0
    %675 = vmatpush.msra.mxu0 0.0
    %676 = vmatpush.msra.mxu0 %v475
    %677 = vmatpush.msra.mxu0 %v474
    %678 = vmatmul.f32.gmra.mxu0 %v657
    %v679 = vpop.f32.mrf.mxu0
    %v680 = vadd.f32 %v651, %v679
    %681 = vmatmul.f32.gmra.mxu0 %v660
    %v682 = vpop.f32.mrf.mxu0
    %v683 = vadd.f32 %v654, %v682
    %684 = vdwg.mxu0
    %v685 = vadd.f32 %v57, %v680
    %v686 = vadd.f32 %v58, %v683
    %v687 = vld [vmem:[%s10] sm:$0x1]
    %v689 = vperm.slane %v687, 0
    %v691 = vadd.f32 %v685, %v689
    %v692 = vadd.f32 %v686, %v689
    %v693 = vld [vmem:[%s11] sm:$0x1]
    %v694 = vld [vmem:[%s12] sm:$0x1]
    %v695 = vsel %vm65, %v691, 0.0
    %696 = vadd.xlane.f32.xlu0 %v695
    %v697 = vpop.xlane.xlu0 %696
    %v698 = vsel %vm65, %v692, 0.0
    %699 = vadd.xlane.f32.xlu0 %v698
    %v700 = vpop.xlane.xlu0 %699
    %v701 = vmul.f32 %v697, %v78
    %v702 = vmul.f32 %v700, %v78
    %v703 = vsub.f32 %v691, %v701
    %v704 = vsub.f32 %v692, %v702
    %v705 = vmul.f32 %v703, %v703
    %v706 = vmul.f32 %v704, %v704
    %v707 = vsel %vm65, %v705, 0.0
    %708 = vadd.xlane.f32.xlu0 %v707
    %v709 = vpop.xlane.xlu0 %708
    %v710 = vsel %vm65, %v706, 0.0
    %711 = vadd.xlane.f32.xlu0 %v710
    %v712 = vpop.xlane.xlu0 %711
    %v713 = vmul.f32 %v709, %v78
    %v714 = vmul.f32 %v712, %v78
    %v715 = vadd.f32 %v713, 1e-05
    %v716 = vadd.f32 %v714, 1e-05
    %v717 = vrsqrt.pop %v715
    %v718 = vmul.f32 %v717, %v715
    %v719 = vmul.f32 %v718, %v717
    %v720 = vmul.f32 0.5, %v719
    %v721 = vsub.f32 1.5, %v720
    %v722 = vmul.f32 %v717, %v721
    %vm723 = vweird.f32 %v715
    %vm724 = vweird.f32 %v717
    %vm725 = vmor %vm723, %vm724
    %v726 = vsel %vm725, %v717, %v722
    %v727 = vrsqrt.pop %v716
    %v728 = vmul.f32 %v727, %v716
    %v729 = vmul.f32 %v728, %v727
    %v730 = vmul.f32 0.5, %v729
    %v731 = vsub.f32 1.5, %v730
    %v732 = vmul.f32 %v727, %v731
    %vm733 = vweird.f32 %v716
    %vm734 = vweird.f32 %v727
    %vm735 = vmor %vm733, %vm734
    %v736 = vsel %vm735, %v727, %v732
    %v737 = vmul.f32 %v703, %v726
    %v738 = vmul.f32 %v704, %v736
    %v740 = vperm.slane %v693, 0
    %v742 = vmul.f32 %v737, %v740
    %v743 = vmul.f32 %v738, %v740
    %v745 = vperm.slane %v694, 0
    %v747 = vadd.f32 %v742, %v745
    %v748 = vadd.f32 %v743, %v745
    %v749 = vld [vmem:[%s13] sm:$0xff]
    %v750 = vld [vmem:[%s13 + $0x8] sm:$0xff]
    %v751 = vld [vmem:[%s13 + $0x10] sm:$0xff]
    %v752 = vld [vmem:[%s13 + $0x18] sm:$0xff]
    %v753 = vld [vmem:[%s13 + $0x20] sm:$0xff]
    %v754 = vld [vmem:[%s13 + $0x28] sm:$0xff]
    %v755 = vld [vmem:[%s13 + $0x30] sm:$0xff]
    %v756 = vld [vmem:[%s13 + $0x38] sm:$0xff]
    %v757 = vld [vmem:[%s14] sm:$0x3]
    %v759 = vperm.slane %v757, 0
    %v760 = vperm.slane %v757, 1
    %v764 = vsel %vm65, %v747, 0
    %v767 = vsel %vm65, %v748, 0
    %769 = vmatpush.msra.mxu0 0.0
    %770 = vmatpush.msra.mxu0 0.0
    %771 = vmatpush.msra.mxu0 0.0
    %772 = vmatpush.msra.mxu0 0.0
    %773 = vmatpush.msra.mxu0 0.0
    %774 = vmatpush.msra.mxu0 0.0
    %775 = vmatpush.msra.mxu0 0.0
    %776 = vmatpush.msra.mxu0 0.0
    %777 = vmatpush.msra.mxu0 0.0
    %778 = vmatpush.msra.mxu0 0.0
    %779 = vmatpush.msra.mxu0 0.0
    %780 = vmatpush.msra.mxu0 0.0
    %781 = vmatpush.msra.mxu0 %v755
    %782 = vmatpush.msra.mxu0 %v753
    %783 = vmatpush.msra.mxu0 %v751
    %784 = vmatpush.msra.mxu0 %v749
    %785 = vmatmul.f32.gmra.mxu0 %v764
    %v786 = vpop.f32.mrf.mxu0
    %v787 = vadd.f32 %v759, %v786
    %788 = vmatmul.f32.gmra.mxu0 %v767
    %v789 = vpop.f32.mrf.mxu0
    %v790 = vadd.f32 %v759, %v789
    %791 = vdwg.mxu0
    %792 = vmatpush.msra.mxu0 0.0
    %793 = vmatpush.msra.mxu0 0.0
    %794 = vmatpush.msra.mxu0 0.0
    %795 = vmatpush.msra.mxu0 0.0
    %796 = vmatpush.msra.mxu0 0.0
    %797 = vmatpush.msra.mxu0 0.0
    %798 = vmatpush.msra.mxu0 0.0
    %799 = vmatpush.msra.mxu0 0.0
    %800 = vmatpush.msra.mxu0 0.0
    %801 = vmatpush.msra.mxu0 0.0
    %802 = vmatpush.msra.mxu0 0.0
    %803 = vmatpush.msra.mxu0 0.0
    %804 = vmatpush.msra.mxu0 %v756
    %805 = vmatpush.msra.mxu0 %v754
    %806 = vmatpush.msra.mxu0 %v752
    %807 = vmatpush.msra.mxu0 %v750
    %808 = vmatmul.f32.gmra.mxu0 %v764
    %v809 = vpop.f32.mrf.mxu0
    %v810 = vadd.f32 %v760, %v809
    %811 = vmatmul.f32.gmra.mxu0 %v767
    %v812 = vpop.f32.mrf.mxu0
    %v813 = vadd.f32 %v760, %v812
    %814 = vdwg.mxu0
    %v815 = vmul.f32 %v810, 0.5
    %v816 = vmul.f32 %v813, 0.5
    %v817 = vmul.f32 %v810, 0.70710677
    %v818 = vmul.f32 %v813, 0.70710677
    %v819 = vmul.f32 %v817, %v817
    %v820 = vmin.f32 16.0, %v819
    %v821 = vmul.f32 %v820, 2.1237322e-06
    %v822 = vadd.f32 %v821, 0.00028619796
    %v823 = vmul.f32 %v820, %v822
    %v824 = vadd.f32 %v823, 0.0036580483
    %v825 = vmul.f32 %v820, %v824
    %v826 = vadd.f32 %v825, 0.05243302
    %v827 = vmul.f32 %v820, %v826
    %v828 = vadd.f32 %v827, 0.18741608
    %v829 = vmul.f32 %v820, %v828
    %v830 = vadd.f32 %v829, 1.1283791
    %v831 = vmul.f32 %v817, %v830
    %v832 = vmul.f32 %v820, 3.8918573e-05
    %v833 = vadd.f32 %v832, 0.001143296
    %v834 = vmul.f32 %v820, %v833
    %v835 = vadd.f32 %v834, 0.014752088
    %v836 = vmul.f32 %v820, %v835
    %v837 = vadd.f32 %v836, 0.112945676
    %v838 = vmul.f32 %v820, %v837
    %v839 = vadd.f32 %v838, 0.4994258
    %v840 = vmul.f32 %v820, %v839
    %v841 = vadd.f32 %v840, 1.0
    %v842 = vrcp.pop %v841
    %v843 = vmul.f32 %v841, %v842
    %v844 = vsub.f32 1.0, %v843
    %v845 = vmul.f32 %v842, %v844
    %v846 = vadd.f32 %v842, %v845
    %vm847 = vweird.f32 %v841
    %vm848 = vweird.f32 %v842
    %vm849 = vmor %vm847, %vm848
    %v850 = vsel %vm849, %v842, %v846
    %v851 = vand.u32 2147483647, %v841
    %vm852 = vcmp.eq.f32.partialorder %v851, 8.507059e+37
    %v853 = vand.u32 %v841, 2147483648
    %v854 = vor.u32 1.1754944e-38, %v853
    %v855 = vsel %vm852, %v854, %v850
    %v856 = vmul.f32 %v831, %v855
    %v857 = vmin.f32 %v856, 1.0
    %v858 = vmax.f32 %v857, -1.0
    %v859 = vmul.f32 %v818, %v818
    %v860 = vmin.f32 16.0, %v859
    %v861 = vmul.f32 %v860, 2.1237322e-06
    %v862 = vadd.f32 %v861, 0.00028619796
    %v863 = vmul.f32 %v860, %v862
    %v864 = vadd.f32 %v863, 0.0036580483
    %v865 = vmul.f32 %v860, %v864
    %v866 = vadd.f32 %v865, 0.05243302
    %v867 = vmul.f32 %v860, %v866
    %v868 = vadd.f32 %v867, 0.18741608
    %v869 = vmul.f32 %v860, %v868
    %v870 = vadd.f32 %v869, 1.1283791
    %v871 = vmul.f32 %v818, %v870
    %v872 = vmul.f32 %v860, 3.8918573e-05
    %v873 = vadd.f32 %v872, 0.001143296
    %v874 = vmul.f32 %v860, %v873
    %v875 = vadd.f32 %v874, 0.014752088
    %v876 = vmul.f32 %v860, %v875
    %v877 = vadd.f32 %v876, 0.112945676
    %v878 = vmul.f32 %v860, %v877
    %v879 = vadd.f32 %v878, 0.4994258
    %v880 = vmul.f32 %v860, %v879
    %v881 = vadd.f32 %v880, 1.0
    %v882 = vrcp.pop %v881
    %v883 = vmul.f32 %v881, %v882
    %v884 = vsub.f32 1.0, %v883
    %v885 = vmul.f32 %v882, %v884
    %v886 = vadd.f32 %v882, %v885
    %vm887 = vweird.f32 %v881
    %vm888 = vweird.f32 %v882
    %vm889 = vmor %vm887, %vm888
    %v890 = vsel %vm889, %v882, %v886
    %v891 = vand.u32 2147483647, %v881
    %vm892 = vcmp.eq.f32.partialorder %v891, 8.507059e+37
    %v893 = vand.u32 %v881, 2147483648
    %v894 = vor.u32 1.1754944e-38, %v893
    %v895 = vsel %vm892, %v894, %v890
    %v896 = vmul.f32 %v871, %v895
    %v897 = vmin.f32 %v896, 1.0
    %v898 = vmax.f32 %v897, -1.0
    %v899 = vadd.f32 %v858, 1.0
    %v900 = vadd.f32 %v898, 1.0
    %v901 = vmul.f32 %v815, %v899
    %v902 = vmul.f32 %v816, %v900
    %v903 = vmul.f32 %v787, %v901
    %v904 = vmul.f32 %v790, %v902
    %v905 = vld [vmem:[%s15] sm:$0xff]
    %v906 = vld [vmem:[%s15 + $0x8] sm:$0xff]
    %v907 = vld [vmem:[%s15 + $0x10] sm:$0xff]
    %v908 = vld [vmem:[%s15 + $0x18] sm:$0xff]
    %v909 = vld [vmem:[%s15 + $0x20] sm:$0xff]
    %v910 = vld [vmem:[%s15 + $0x28] sm:$0xff]
    %v911 = vld [vmem:[%s15 + $0x30] sm:$0xff]
    %v912 = vld [vmem:[%s15 + $0x38] sm:$0xff]
    %v913 = vld [vmem:[%s15 + $0x40] sm:$0xff]
    %v914 = vld [vmem:[%s15 + $0x48] sm:$0xff]
    %v915 = vld [vmem:[%s15 + $0x50] sm:$0xff]
    %v916 = vld [vmem:[%s15 + $0x58] sm:$0xff]
    %v917 = vld [vmem:[%s15 + $0x60] sm:$0xff]
    %v918 = vld [vmem:[%s15 + $0x68] sm:$0xff]
    %v919 = vld [vmem:[%s15 + $0x70] sm:$0xff]
    %v920 = vld [vmem:[%s15 + $0x78] sm:$0xff]
    %v921 = vld [vmem:[%s16] sm:$0x1]
    %v923 = vperm.slane %v921, 0
    %925 = vmatpush.msra.mxu0 %v920
    %926 = vmatpush.msra.mxu0 %v919
    %927 = vmatpush.msra.mxu0 %v918
    %928 = vmatpush.msra.mxu0 %v917
    %929 = vmatpush.msra.mxu0 %v916
    %930 = vmatpush.msra.mxu0 %v915
    %931 = vmatpush.msra.mxu0 %v914
    %932 = vmatpush.msra.mxu0 %v913
    %933 = vmatpush.msra.mxu0 %v912
    %934 = vmatpush.msra.mxu0 %v911
    %935 = vmatpush.msra.mxu0 %v910
    %936 = vmatpush.msra.mxu0 %v909
    %937 = vmatpush.msra.mxu0 %v908
    %938 = vmatpush.msra.mxu0 %v907
    %939 = vmatpush.msra.mxu0 %v906
    %940 = vmatpush.msra.mxu0 %v905
    %941 = vmatmul.f32.gmra.mxu0 %v903
    %v942 = vpop.f32.mrf.mxu0
    %v943 = vadd.f32 %v923, %v942
    %944 = vmatmul.f32.gmra.mxu0 %v904
    %v945 = vpop.f32.mrf.mxu0
    %v946 = vadd.f32 %v923, %v945
    %947 = vdwg.mxu0
    %v948 = vadd.f32 %v691, %v943
    %v949 = vadd.f32 %v692, %v946
    %s950 = scalar_lea.vmem %s2, 1
    %v951 = vld [vmem:[%s950] sm:$0x1]
    %s952 = scalar_lea.vmem %s3, 1
    %v953 = vld [vmem:[%s952] sm:$0x1]
    %v954 = vsel %vm65, %v948, 0.0
    %955 = vadd.xlane.f32.xlu0 %v954
    %v956 = vpop.xlane.xlu0 %955
    %v957 = vsel %vm65, %v949, 0.0
    %958 = vadd.xlane.f32.xlu0 %v957
    %v959 = vpop.xlane.xlu0 %958
    %v960 = vmul.f32 %v956, %v78
    %v961 = vmul.f32 %v959, %v78
    %v962 = vsub.f32 %v948, %v960
    %v963 = vsub.f32 %v949, %v961
    %v964 = vmul.f32 %v962, %v962
    %v965 = vmul.f32 %v963, %v963
    %v966 = vsel %vm65, %v964, 0.0
    %967 = vadd.xlane.f32.xlu0 %v966
    %v968 = vpop.xlane.xlu0 %967
    %v969 = vsel %vm65, %v965, 0.0
    %970 = vadd.xlane.f32.xlu0 %v969
    %v971 = vpop.xlane.xlu0 %970
    %v972 = vmul.f32 %v968, %v78
    %v973 = vmul.f32 %v971, %v78
    %v974 = vadd.f32 %v972, 1e-05
    %v975 = vadd.f32 %v973, 1e-05
    %v976 = vrsqrt.pop %v974
    %v977 = vmul.f32 %v976, %v974
    %v978 = vmul.f32 %v977, %v976
    %v979 = vmul.f32 0.5, %v978
    %v980 = vsub.f32 1.5, %v979
    %v981 = vmul.f32 %v976, %v980
    %vm982 = vweird.f32 %v974
    %vm983 = vweird.f32 %v976
    %vm984 = vmor %vm982, %vm983
    %v985 = vsel %vm984, %v976, %v981
    %v986 = vrsqrt.pop %v975
    %v987 = vmul.f32 %v986, %v975
    %v988 = vmul.f32 %v987, %v986
    %v989 = vmul.f32 0.5, %v988
    %v990 = vsub.f32 1.5, %v989
    %v991 = vmul.f32 %v986, %v990
    %vm992 = vweird.f32 %v975
    %vm993 = vweird.f32 %v986
    %vm994 = vmor %vm992, %vm993
    %v995 = vsel %vm994, %v986, %v991
    %v996 = vmul.f32 %v962, %v985
    %v997 = vmul.f32 %v963, %v995
    %v999 = vperm.slane %v951, 0
    %v1001 = vmul.f32 %v996, %v999
    %v1002 = vmul.f32 %v997, %v999
    %v1004 = vperm.slane %v953, 0
    %v1006 = vadd.f32 %v1001, %v1004
    %v1007 = vadd.f32 %v1002, %v1004
    %s1008 = scalar_lea.vmem %s4, 1
    %v1009 = vld [vmem:[%s1008] sm:$0x1]
    %s1010 = scalar_lea.vmem %s5, 1
    %v1011 = vld [vmem:[%s1010] sm:$0x1]
    %v1013 = vperm.slane %v1009, 0
    %v1015 = vmul.f32 %v221, %v1013
    %v1016 = vmul.f32 %v222, %v1013
    %v1017 = vmul.f32 %v223, %v1013
    %v1018 = vmul.f32 %v224, %v1013
    %v1020 = vperm.slane %v1011, 0
    %v1022 = vadd.f32 %v1015, %v1020
    %v1023 = vadd.f32 %v1016, %v1020
    %v1024 = vadd.f32 %v1017, %v1020
    %v1025 = vadd.f32 %v1018, %v1020
    %s1026 = scalar_lea.vmem %s6, 32
    %v1027 = vld [vmem:[%s1026] sm:$0xff]
    %v1028 = vld [vmem:[%s1026 + $0x8] sm:$0xff]
    %v1029 = vld [vmem:[%s1026 + $0x10] sm:$0xff]
    %v1030 = vld [vmem:[%s1026 + $0x18] sm:$0xff]
    %v1032 = vsel %vm65, %v1006, 0
    %v1035 = vsel %vm65, %v1007, 0
    %1037 = vmatpush.msra.mxu0 0.0
    %1038 = vmatpush.msra.mxu0 0.0
    %1039 = vmatpush.msra.mxu0 0.0
    %1040 = vmatpush.msra.mxu0 0.0
    %1041 = vmatpush.msra.mxu0 0.0
    %1042 = vmatpush.msra.mxu0 0.0
    %1043 = vmatpush.msra.mxu0 0.0
    %1044 = vmatpush.msra.mxu0 0.0
    %1045 = vmatpush.msra.mxu0 0.0
    %1046 = vmatpush.msra.mxu0 0.0
    %1047 = vmatpush.msra.mxu0 0.0
    %1048 = vmatpush.msra.mxu0 0.0
    %1049 = vmatpush.msra.mxu0 %v1030
    %1050 = vmatpush.msra.mxu0 %v1029
    %1051 = vmatpush.msra.mxu0 %v1028
    %1052 = vmatpush.msra.mxu0 %v1027
    %1053 = vmatmul.f32.gmra.mxu0 %v1032
    %v1054 = vpop.f32.mrf.mxu0
    %v1055 = vadd.f32 0.0, %v1054
    %1056 = vmatmul.f32.gmra.mxu0 %v1035
    %v1057 = vpop.f32.mrf.mxu0
    %v1058 = vadd.f32 0.0, %v1057
    %1059 = vdwg.mxu0
    %v1060 = vmul.f32 %v1055, 0.25
    %v1061 = vmul.f32 %v1058, 0.25
    %s1062 = scalar_lea.vmem %s7, 16
    %v1063 = vld [vmem:[%s1062] sm:$0xff]
    %v1064 = vld [vmem:[%s1062 + $0x8] sm:$0xff]
    %v1066 = vsel %vm129, %v1022, 0
    %v1069 = vsel %vm129, %v1023, 0
    %v1072 = vsel %vm129, %v1024, 0
    %v1075 = vsel %vm129, %v1025, 0
    %1077 = vmatpush.msra.mxu0 0.0
    %1078 = vmatpush.msra.mxu0 0.0
    %1079 = vmatpush.msra.mxu0 0.0
    %1080 = vmatpush.msra.mxu0 0.0
    %1081 = vmatpush.msra.mxu0 0.0
    %1082 = vmatpush.msra.mxu0 0.0
    %1083 = vmatpush.msra.mxu0 0.0
    %1084 = vmatpush.msra.mxu0 0.0
    %1085 = vmatpush.msra.mxu0 0.0
    %1086 = vmatpush.msra.mxu0 0.0
    %1087 = vmatpush.msra.mxu0 0.0
    %1088 = vmatpush.msra.mxu0 0.0
    %1089 = vmatpush.msra.mxu0 0.0
    %1090 = vmatpush.msra.mxu0 0.0
    %1091 = vmatpush.msra.mxu0 %v1064
    %1092 = vmatpush.msra.mxu0 %v1063
    %1093 = vmatmul.f32.gmra.mxu0 %v1066
    %v1094 = vpop.f32.mrf.mxu0
    %v1095 = vadd.f32 0.0, %v1094
    %1096 = vmatmul.f32.gmra.mxu0 %v1069
    %v1097 = vpop.f32.mrf.mxu0
    %v1098 = vadd.f32 0.0, %v1097
    %1099 = vmatmul.f32.gmra.mxu0 %v1072
    %v1100 = vpop.f32.mrf.mxu0
    %v1101 = vadd.f32 0.0, %v1100
    %1102 = vmatmul.f32.gmra.mxu0 %v1075
    %v1103 = vpop.f32.mrf.mxu0
    %v1104 = vadd.f32 0.0, %v1103
    %1105 = vdwg.mxu0
    %s1106 = scalar_lea.vmem %s8, 16
    %v1107 = vld [vmem:[%s1106] sm:$0xff]
    %v1108 = vld [vmem:[%s1106 + $0x8] sm:$0xff]
    %1109 = vmatpush.msra.mxu0 0.0
    %1110 = vmatpush.msra.mxu0 0.0
    %1111 = vmatpush.msra.mxu0 0.0
    %1112 = vmatpush.msra.mxu0 0.0
    %1113 = vmatpush.msra.mxu0 0.0
    %1114 = vmatpush.msra.mxu0 0.0
    %1115 = vmatpush.msra.mxu0 0.0
    %1116 = vmatpush.msra.mxu0 0.0
    %1117 = vmatpush.msra.mxu0 0.0
    %1118 = vmatpush.msra.mxu0 0.0
    %1119 = vmatpush.msra.mxu0 0.0
    %1120 = vmatpush.msra.mxu0 0.0
    %1121 = vmatpush.msra.mxu0 0.0
    %1122 = vmatpush.msra.mxu0 0.0
    %1123 = vmatpush.msra.mxu0 %v1108
    %1124 = vmatpush.msra.mxu0 %v1107
    %1125 = vmatmul.f32.gmra.mxu0 %v1066
    %v1126 = vpop.f32.mrf.mxu0
    %v1127 = vadd.f32 0.0, %v1126
    %1128 = vmatmul.f32.gmra.mxu0 %v1069
    %v1129 = vpop.f32.mrf.mxu0
    %v1130 = vadd.f32 0.0, %v1129
    %1131 = vmatmul.f32.gmra.mxu0 %v1072
    %v1132 = vpop.f32.mrf.mxu0
    %v1133 = vadd.f32 0.0, %v1132
    %1134 = vmatmul.f32.gmra.mxu0 %v1075
    %v1135 = vpop.f32.mrf.mxu0
    %v1136 = vadd.f32 0.0, %v1135
    %1137 = vdwg.mxu0
    %v1139 = vsel %vm129, %v1060, 0
    %v1142 = vsel %vm129, %v1095, 0
    %v1145 = vsel %vm129, %v1098, 0
    %1147 = vmatpush.xpose.msra.mxu0 0.0
    %1148 = vmatpush.xpose.msra.mxu0 0.0
    %1149 = vmatpush.xpose.msra.mxu0 0.0
    %1150 = vmatpush.xpose.msra.mxu0 0.0
    %1151 = vmatpush.xpose.msra.mxu0 0.0
    %1152 = vmatpush.xpose.msra.mxu0 0.0
    %1153 = vmatpush.xpose.msra.mxu0 0.0
    %1154 = vmatpush.xpose.msra.mxu0 0.0
    %1155 = vmatpush.xpose.msra.mxu0 0.0
    %1156 = vmatpush.xpose.msra.mxu0 0.0
    %1157 = vmatpush.xpose.msra.mxu0 0.0
    %1158 = vmatpush.xpose.msra.mxu0 0.0
    %1159 = vmatpush.xpose.msra.mxu0 0.0
    %1160 = vmatpush.xpose.msra.mxu0 0.0
    %1161 = vmatpush.xpose.msra.mxu0 %v1145
    %1162 = vmatpush.xpose.msra.mxu0 %v1142
    %1163 = vmatmul.f32.gmra.mxu0 %v1139
    %v1164 = vpop.f32.mrf.mxu0
    %v1165 = vadd.f32 0.0, %v1164
    %1166 = vdwg.mxu0
    %v1168 = vsel %vm129, %v1061, 0
    %v1171 = vsel %vm129, %v1101, 0
    %v1174 = vsel %vm129, %v1104, 0
    %1176 = vmatpush.xpose.msra.mxu0 0.0
    %1177 = vmatpush.xpose.msra.mxu0 0.0
    %1178 = vmatpush.xpose.msra.mxu0 0.0
    %1179 = vmatpush.xpose.msra.mxu0 0.0
    %1180 = vmatpush.xpose.msra.mxu0 0.0
    %1181 = vmatpush.xpose.msra.mxu0 0.0
    %1182 = vmatpush.xpose.msra.mxu0 0.0
    %1183 = vmatpush.xpose.msra.mxu0 0.0
    %1184 = vmatpush.xpose.msra.mxu0 0.0
    %1185 = vmatpush.xpose.msra.mxu0 0.0
    %1186 = vmatpush.xpose.msra.mxu0 0.0
    %1187 = vmatpush.xpose.msra.mxu0 0.0
    %1188 = vmatpush.xpose.msra.mxu0 0.0
    %1189 = vmatpush.xpose.msra.mxu0 0.0
    %1190 = vmatpush.xpose.msra.mxu0 %v1174
    %1191 = vmatpush.xpose.msra.mxu0 %v1171
    %1192 = vmatmul.f32.gmra.mxu0 %v1168
    %v1193 = vpop.f32.mrf.mxu0
    %v1194 = vadd.f32 0.0, %v1193
    %1195 = vdwg.mxu0
    %v1196 = vsel %vm129, %v1165, -inf
    %1197 = vmax.xlane.f32.xlu0 %v1196
    %v1198 = vpop.xlane.xlu0 %1197
    %v1199 = vsel %vm129, %v1194, -inf
    %1200 = vmax.xlane.f32.xlu0 %v1199
    %v1201 = vpop.xlane.xlu0 %1200
    %v1202 = vsub.f32 %v1165, %v1198
    %v1203 = vsub.f32 %v1194, %v1201
    %v1204 = vmul.f32 %v1202, 1.442695
    %v1205 = vpow.pop %v1204
    %v1206 = vmul.f32 %v1203, 1.442695
    %v1207 = vpow.pop %v1206
    %v1208 = vsel %vm129, %v1205, 0.0
    %1209 = vadd.xlane.f32.xlu0 %v1208
    %v1210 = vpop.xlane.xlu0 %1209
    %v1211 = vsel %vm129, %v1207, 0.0
    %1212 = vadd.xlane.f32.xlu0 %v1211
    %v1213 = vpop.xlane.xlu0 %1212
    %v1214 = vrcp.pop %v1210
    %v1215 = vrcp.pop %v1213
    %v1216 = vmul.f32 %v1205, %v1214
    %v1217 = vmul.f32 %v1207, %v1215
    %v1219 = vsel %vm129, %v1216, 0
    %1221 = vmatpush.msra.mxu0 0.0
    %1222 = vmatpush.msra.mxu0 0.0
    %1223 = vmatpush.msra.mxu0 0.0
    %1224 = vmatpush.msra.mxu0 0.0
    %1225 = vmatpush.msra.mxu0 0.0
    %1226 = vmatpush.msra.mxu0 0.0
    %1227 = vmatpush.msra.mxu0 0.0
    %1228 = vmatpush.msra.mxu0 0.0
    %1229 = vmatpush.msra.mxu0 0.0
    %1230 = vmatpush.msra.mxu0 0.0
    %1231 = vmatpush.msra.mxu0 0.0
    %1232 = vmatpush.msra.mxu0 0.0
    %1233 = vmatpush.msra.mxu0 0.0
    %1234 = vmatpush.msra.mxu0 0.0
    %1235 = vmatpush.msra.mxu0 %v1130
    %1236 = vmatpush.msra.mxu0 %v1127
    %1237 = vmatmul.f32.gmra.mxu0 %v1219
    %v1238 = vpop.f32.mrf.mxu0
    %v1239 = vadd.f32 0.0, %v1238
    %1240 = vdwg.mxu0
    %v1242 = vsel %vm129, %v1217, 0
    %1244 = vmatpush.msra.mxu0 0.0
    %1245 = vmatpush.msra.mxu0 0.0
    %1246 = vmatpush.msra.mxu0 0.0
    %1247 = vmatpush.msra.mxu0 0.0
    %1248 = vmatpush.msra.mxu0 0.0
    %1249 = vmatpush.msra.mxu0 0.0
    %1250 = vmatpush.msra.mxu0 0.0
    %1251 = vmatpush.msra.mxu0 0.0
    %1252 = vmatpush.msra.mxu0 0.0
    %1253 = vmatpush.msra.mxu0 0.0
    %1254 = vmatpush.msra.mxu0 0.0
    %1255 = vmatpush.msra.mxu0 0.0
    %1256 = vmatpush.msra.mxu0 0.0
    %1257 = vmatpush.msra.mxu0 0.0
    %1258 = vmatpush.msra.mxu0 %v1136
    %1259 = vmatpush.msra.mxu0 %v1133
    %1260 = vmatmul.f32.gmra.mxu0 %v1242
    %v1261 = vpop.f32.mrf.mxu0
    %v1262 = vadd.f32 0.0, %v1261
    %1263 = vdwg.mxu0
    %s1264 = scalar_lea.vmem %s9, 32
    %v1265 = vld [vmem:[%s1264] sm:$0xff]
    %v1266 = vld [vmem:[%s1264 + $0x8] sm:$0xff]
    %1267 = vrot.lane.b32.xlu0 %v1060, 112
    %v1268 = vpop.permute.xlu0 %1267
    %1269 = vrot.lane.b32.xlu0 %v1095, 112
    %v1270 = vpop.permute.xlu0 %1269
    %1271 = vrot.lane.b32.xlu0 %v1098, 112
    %v1272 = vpop.permute.xlu0 %1271
    %v1273 = vsel %vm129, %v1268, 0
    %v1275 = vsel %vm129, %v1270, 0
    %v1277 = vsel %vm129, %v1272, 0
    %1279 = vmatpush.xpose.msra.mxu0 0.0
    %1280 = vmatpush.xpose.msra.mxu0 0.0
    %1281 = vmatpush.xpose.msra.mxu0 0.0
    %1282 = vmatpush.xpose.msra.mxu0 0.0
    %1283 = vmatpush.xpose.msra.mxu0 0.0
    %1284 = vmatpush.xpose.msra.mxu0 0.0
    %1285 = vmatpush.xpose.msra.mxu0 0.0
    %1286 = vmatpush.xpose.msra.mxu0 0.0
    %1287 = vmatpush.xpose.msra.mxu0 0.0
    %1288 = vmatpush.xpose.msra.mxu0 0.0
    %1289 = vmatpush.xpose.msra.mxu0 0.0
    %1290 = vmatpush.xpose.msra.mxu0 0.0
    %1291 = vmatpush.xpose.msra.mxu0 0.0
    %1292 = vmatpush.xpose.msra.mxu0 0.0
    %1293 = vmatpush.xpose.msra.mxu0 %v1277
    %1294 = vmatpush.xpose.msra.mxu0 %v1275
    %1295 = vmatmul.f32.gmra.mxu0 %v1273
    %v1296 = vpop.f32.mrf.mxu0
    %v1297 = vadd.f32 0.0, %v1296
    %1298 = vdwg.mxu0
    %1299 = vrot.lane.b32.xlu0 %v1061, 112
    %v1300 = vpop.permute.xlu0 %1299
    %1301 = vrot.lane.b32.xlu0 %v1101, 112
    %v1302 = vpop.permute.xlu0 %1301
    %1303 = vrot.lane.b32.xlu0 %v1104, 112
    %v1304 = vpop.permute.xlu0 %1303
    %v1305 = vsel %vm129, %v1300, 0
    %v1307 = vsel %vm129, %v1302, 0
    %v1309 = vsel %vm129, %v1304, 0
    %1311 = vmatpush.xpose.msra.mxu0 0.0
    %1312 = vmatpush.xpose.msra.mxu0 0.0
    %1313 = vmatpush.xpose.msra.mxu0 0.0
    %1314 = vmatpush.xpose.msra.mxu0 0.0
    %1315 = vmatpush.xpose.msra.mxu0 0.0
    %1316 = vmatpush.xpose.msra.mxu0 0.0
    %1317 = vmatpush.xpose.msra.mxu0 0.0
    %1318 = vmatpush.xpose.msra.mxu0 0.0
    %1319 = vmatpush.xpose.msra.mxu0 0.0
    %1320 = vmatpush.xpose.msra.mxu0 0.0
    %1321 = vmatpush.xpose.msra.mxu0 0.0
    %1322 = vmatpush.xpose.msra.mxu0 0.0
    %1323 = vmatpush.xpose.msra.mxu0 0.0
    %1324 = vmatpush.xpose.msra.mxu0 0.0
    %1325 = vmatpush.xpose.msra.mxu0 %v1309
    %1326 = vmatpush.xpose.msra.mxu0 %v1307
    %1327 = vmatmul.f32.gmra.mxu0 %v1305
    %v1328 = vpop.f32.mrf.mxu0
    %v1329 = vadd.f32 0.0, %v1328
    %1330 = vdwg.mxu0
    %v1331 = vsel %vm129, %v1297, -inf
    %1332 = vmax.xlane.f32.xlu0 %v1331
    %v1333 = vpop.xlane.xlu0 %1332
    %v1334 = vsel %vm129, %v1329, -inf
    %1335 = vmax.xlane.f32.xlu0 %v1334
    %v1336 = vpop.xlane.xlu0 %1335
    %v1337 = vsub.f32 %v1297, %v1333
    %v1338 = vsub.f32 %v1329, %v1336
    %v1339 = vmul.f32 %v1337, 1.442695
    %v1340 = vpow.pop %v1339
    %v1341 = vmul.f32 %v1338, 1.442695
    %v1342 = vpow.pop %v1341
    %v1343 = vsel %vm129, %v1340, 0.0
    %1344 = vadd.xlane.f32.xlu0 %v1343
    %v1345 = vpop.xlane.xlu0 %1344
    %v1346 = vsel %vm129, %v1342, 0.0
    %1347 = vadd.xlane.f32.xlu0 %v1346
    %v1348 = vpop.xlane.xlu0 %1347
    %v1349 = vrcp.pop %v1345
    %v1350 = vrcp.pop %v1348
    %v1351 = vmul.f32 %v1340, %v1349
    %v1352 = vmul.f32 %v1342, %v1350
    %1355 = vrot.lane.b32.xlu0 %v1127, 112
    %v1356 = vpop.permute.xlu0 %1355
    %1357 = vrot.lane.b32.xlu0 %v1130, 112
    %v1358 = vpop.permute.xlu0 %1357
    %v1362 = vsel %vm129, %v1351, 0
    %1364 = vmatpush.msra.mxu0 0.0
    %1365 = vmatpush.msra.mxu0 0.0
    %1366 = vmatpush.msra.mxu0 0.0
    %1367 = vmatpush.msra.mxu0 0.0
    %1368 = vmatpush.msra.mxu0 0.0
    %1369 = vmatpush.msra.mxu0 0.0
    %1370 = vmatpush.msra.mxu0 0.0
    %1371 = vmatpush.msra.mxu0 0.0
    %1372 = vmatpush.msra.mxu0 0.0
    %1373 = vmatpush.msra.mxu0 0.0
    %1374 = vmatpush.msra.mxu0 0.0
    %1375 = vmatpush.msra.mxu0 0.0
    %1376 = vmatpush.msra.mxu0 0.0
    %1377 = vmatpush.msra.mxu0 0.0
    %1378 = vmatpush.msra.mxu0 %v1358
    %1379 = vmatpush.msra.mxu0 %v1356
    %1380 = vmatmul.f32.gmra.mxu0 %v1362
    %v1381 = vpop.f32.mrf.mxu0
    %v1382 = vadd.f32 0.0, %v1381
    %1383 = vdwg.mxu0
    %1386 = vrot.lane.b32.xlu0 %v1133, 112
    %v1387 = vpop.permute.xlu0 %1386
    %1388 = vrot.lane.b32.xlu0 %v1136, 112
    %v1389 = vpop.permute.xlu0 %1388
    %v1393 = vsel %vm129, %v1352, 0
    %1395 = vmatpush.msra.mxu0 0.0
    %1396 = vmatpush.msra.mxu0 0.0
    %1397 = vmatpush.msra.mxu0 0.0
    %1398 = vmatpush.msra.mxu0 0.0
    %1399 = vmatpush.msra.mxu0 0.0
    %1400 = vmatpush.msra.mxu0 0.0
    %1401 = vmatpush.msra.mxu0 0.0
    %1402 = vmatpush.msra.mxu0 0.0
    %1403 = vmatpush.msra.mxu0 0.0
    %1404 = vmatpush.msra.mxu0 0.0
    %1405 = vmatpush.msra.mxu0 0.0
    %1406 = vmatpush.msra.mxu0 0.0
    %1407 = vmatpush.msra.mxu0 0.0
    %1408 = vmatpush.msra.mxu0 0.0
    %1409 = vmatpush.msra.mxu0 %v1389
    %1410 = vmatpush.msra.mxu0 %v1387
    %1411 = vmatmul.f32.gmra.mxu0 %v1393
    %v1412 = vpop.f32.mrf.mxu0
    %v1413 = vadd.f32 0.0, %v1412
    %1414 = vdwg.mxu0
    %s1415 = scalar_lea.vmem %s9, 48
    %v1416 = vld [vmem:[%s1415] sm:$0xff]
    %v1417 = vld [vmem:[%s1415 + $0x8] sm:$0xff]
    %v1419 = vsel %vm129, %v1382, 0
    %v1422 = vsel %vm129, %v1413, 0
    %1424 = vmatpush.msra.mxu0 0.0
    %1425 = vmatpush.msra.mxu0 0.0
    %1426 = vmatpush.msra.mxu0 0.0
    %1427 = vmatpush.msra.mxu0 0.0
    %1428 = vmatpush.msra.mxu0 0.0
    %1429 = vmatpush.msra.mxu0 0.0
    %1430 = vmatpush.msra.mxu0 0.0
    %1431 = vmatpush.msra.mxu0 0.0
    %1432 = vmatpush.msra.mxu0 0.0
    %1433 = vmatpush.msra.mxu0 0.0
    %1434 = vmatpush.msra.mxu0 0.0
    %1435 = vmatpush.msra.mxu0 0.0
    %1436 = vmatpush.msra.mxu0 0.0
    %1437 = vmatpush.msra.mxu0 0.0
    %1438 = vmatpush.msra.mxu0 %v1417
    %1439 = vmatpush.msra.mxu0 %v1416
    %1440 = vmatmul.f32.gmra.mxu0 %v1419
    %v1441 = vpop.f32.mrf.mxu0
    %v1442 = vadd.f32 0.0, %v1441
    %1443 = vmatmul.f32.gmra.mxu0 %v1422
    %v1444 = vpop.f32.mrf.mxu0
    %v1445 = vadd.f32 0.0, %v1444
    %1446 = vdwg.mxu0
    %v1448 = vsel %vm129, %v1239, 0
    %v1451 = vsel %vm129, %v1262, 0
    %1453 = vmatpush.msra.mxu0 0.0
    %1454 = vmatpush.msra.mxu0 0.0
    %1455 = vmatpush.msra.mxu0 0.0
    %1456 = vmatpush.msra.mxu0 0.0
    %1457 = vmatpush.msra.mxu0 0.0
    %1458 = vmatpush.msra.mxu0 0.0
    %1459 = vmatpush.msra.mxu0 0.0
    %1460 = vmatpush.msra.mxu0 0.0
    %1461 = vmatpush.msra.mxu0 0.0
    %1462 = vmatpush.msra.mxu0 0.0
    %1463 = vmatpush.msra.mxu0 0.0
    %1464 = vmatpush.msra.mxu0 0.0
    %1465 = vmatpush.msra.mxu0 0.0
    %1466 = vmatpush.msra.mxu0 0.0
    %1467 = vmatpush.msra.mxu0 %v1266
    %1468 = vmatpush.msra.mxu0 %v1265
    %1469 = vmatmul.f32.gmra.mxu0 %v1448
    %v1470 = vpop.f32.mrf.mxu0
    %v1471 = vadd.f32 %v1442, %v1470
    %1472 = vmatmul.f32.gmra.mxu0 %v1451
    %v1473 = vpop.f32.mrf.mxu0
    %v1474 = vadd.f32 %v1445, %v1473
    %1475 = vdwg.mxu0
    %v1476 = vadd.f32 %v948, %v1471
    %v1477 = vadd.f32 %v949, %v1474
    %s1478 = scalar_lea.vmem %s10, 1
    %v1479 = vld [vmem:[%s1478] sm:$0x1]
    %v1481 = vperm.slane %v1479, 0
    %v1483 = vadd.f32 %v1476, %v1481
    %v1484 = vadd.f32 %v1477, %v1481
    %s1485 = scalar_lea.vmem %s11, 1
    %v1486 = vld [vmem:[%s1485] sm:$0x1]
    %s1487 = scalar_lea.vmem %s12, 1
    %v1488 = vld [vmem:[%s1487] sm:$0x1]
    %v1489 = vsel %vm65, %v1483, 0.0
    %1490 = vadd.xlane.f32.xlu0 %v1489
    %v1491 = vpop.xlane.xlu0 %1490
    %v1492 = vsel %vm65, %v1484, 0.0
    %1493 = vadd.xlane.f32.xlu0 %v1492
    %v1494 = vpop.xlane.xlu0 %1493
    %v1495 = vmul.f32 %v1491, %v78
    %v1496 = vmul.f32 %v1494, %v78
    %v1497 = vsub.f32 %v1483, %v1495
    %v1498 = vsub.f32 %v1484, %v1496
    %v1499 = vmul.f32 %v1497, %v1497
    %v1500 = vmul.f32 %v1498, %v1498
    %v1501 = vsel %vm65, %v1499, 0.0
    %1502 = vadd.xlane.f32.xlu0 %v1501
    %v1503 = vpop.xlane.xlu0 %1502
    %v1504 = vsel %vm65, %v1500, 0.0
    %1505 = vadd.xlane.f32.xlu0 %v1504
    %v1506 = vpop.xlane.xlu0 %1505
    %v1507 = vmul.f32 %v1503, %v78
    %v1508 = vmul.f32 %v1506, %v78
    %v1509 = vadd.f32 %v1507, 1e-05
    %v1510 = vadd.f32 %v1508, 1e-05
    %v1511 = vrsqrt.pop %v1509
    %v1512 = vmul.f32 %v1511, %v1509
    %v1513 = vmul.f32 %v1512, %v1511
    %v1514 = vmul.f32 0.5, %v1513
    %v1515 = vsub.f32 1.5, %v1514
    %v1516 = vmul.f32 %v1511, %v1515
    %vm1517 = vweird.f32 %v1509
    %vm1518 = vweird.f32 %v1511
    %vm1519 = vmor %vm1517, %vm1518
    %v1520 = vsel %vm1519, %v1511, %v1516
    %v1521 = vrsqrt.pop %v1510
    %v1522 = vmul.f32 %v1521, %v1510
    %v1523 = vmul.f32 %v1522, %v1521
    %v1524 = vmul.f32 0.5, %v1523
    %v1525 = vsub.f32 1.5, %v1524
    %v1526 = vmul.f32 %v1521, %v1525
    %vm1527 = vweird.f32 %v1510
    %vm1528 = vweird.f32 %v1521
    %vm1529 = vmor %vm1527, %vm1528
    %v1530 = vsel %vm1529, %v1521, %v1526
    %v1531 = vmul.f32 %v1497, %v1520
    %v1532 = vmul.f32 %v1498, %v1530
    %v1534 = vperm.slane %v1486, 0
    %v1536 = vmul.f32 %v1531, %v1534
    %v1537 = vmul.f32 %v1532, %v1534
    %v1539 = vperm.slane %v1488, 0
    %v1541 = vadd.f32 %v1536, %v1539
    %v1542 = vadd.f32 %v1537, %v1539
    %s1543 = scalar_lea.vmem %s13, 64
    %v1544 = vld [vmem:[%s1543] sm:$0xff]
    %v1545 = vld [vmem:[%s1543 + $0x8] sm:$0xff]
    %v1546 = vld [vmem:[%s1543 + $0x10] sm:$0xff]
    %v1547 = vld [vmem:[%s1543 + $0x18] sm:$0xff]
    %v1548 = vld [vmem:[%s1543 + $0x20] sm:$0xff]
    %v1549 = vld [vmem:[%s1543 + $0x28] sm:$0xff]
    %v1550 = vld [vmem:[%s1543 + $0x30] sm:$0xff]
    %v1551 = vld [vmem:[%s1543 + $0x38] sm:$0xff]
    %s1552 = scalar_lea.vmem %s14, 2
    %v1553 = vld [vmem:[%s1552] sm:$0x3]
    %v1555 = vperm.slane %v1553, 0
    %v1556 = vperm.slane %v1553, 1
    %v1560 = vsel %vm65, %v1541, 0
    %v1563 = vsel %vm65, %v1542, 0
    %1565 = vmatpush.msra.mxu0 0.0
    %1566 = vmatpush.msra.mxu0 0.0
    %1567 = vmatpush.msra.mxu0 0.0
    %1568 = vmatpush.msra.mxu0 0.0
    %1569 = vmatpush.msra.mxu0 0.0
    %1570 = vmatpush.msra.mxu0 0.0
    %1571 = vmatpush.msra.mxu0 0.0
    %1572 = vmatpush.msra.mxu0 0.0
    %1573 = vmatpush.msra.mxu0 0.0
    %1574 = vmatpush.msra.mxu0 0.0
    %1575 = vmatpush.msra.mxu0 0.0
    %1576 = vmatpush.msra.mxu0 0.0
    %1577 = vmatpush.msra.mxu0 %v1550
    %1578 = vmatpush.msra.mxu0 %v1548
    %1579 = vmatpush.msra.mxu0 %v1546
    %1580 = vmatpush.msra.mxu0 %v1544
    %1581 = vmatmul.f32.gmra.mxu0 %v1560
    %v1582 = vpop.f32.mrf.mxu0
    %v1583 = vadd.f32 %v1555, %v1582
    %1584 = vmatmul.f32.gmra.mxu0 %v1563
    %v1585 = vpop.f32.mrf.mxu0
    %v1586 = vadd.f32 %v1555, %v1585
    %1587 = vdwg.mxu0
    %1588 = vmatpush.msra.mxu0 0.0
    %1589 = vmatpush.msra.mxu0 0.0
    %1590 = vmatpush.msra.mxu0 0.0
    %1591 = vmatpush.msra.mxu0 0.0
    %1592 = vmatpush.msra.mxu0 0.0
    %1593 = vmatpush.msra.mxu0 0.0
    %1594 = vmatpush.msra.mxu0 0.0
    %1595 = vmatpush.msra.mxu0 0.0
    %1596 = vmatpush.msra.mxu0 0.0
    %1597 = vmatpush.msra.mxu0 0.0
    %1598 = vmatpush.msra.mxu0 0.0
    %1599 = vmatpush.msra.mxu0 0.0
    %1600 = vmatpush.msra.mxu0 %v1551
    %1601 = vmatpush.msra.mxu0 %v1549
    %1602 = vmatpush.msra.mxu0 %v1547
    %1603 = vmatpush.msra.mxu0 %v1545
    %1604 = vmatmul.f32.gmra.mxu0 %v1560
    %v1605 = vpop.f32.mrf.mxu0
    %v1606 = vadd.f32 %v1556, %v1605
    %1607 = vmatmul.f32.gmra.mxu0 %v1563
    %v1608 = vpop.f32.mrf.mxu0
    %v1609 = vadd.f32 %v1556, %v1608
    %1610 = vdwg.mxu0
    %v1611 = vmul.f32 %v1606, 0.5
    %v1612 = vmul.f32 %v1609, 0.5
    %v1613 = vmul.f32 %v1606, 0.70710677
    %v1614 = vmul.f32 %v1609, 0.70710677
    %v1615 = vmul.f32 %v1613, %v1613
    %v1616 = vmin.f32 16.0, %v1615
    %v1617 = vmul.f32 %v1616, 2.1237322e-06
    %v1618 = vadd.f32 %v1617, 0.00028619796
    %v1619 = vmul.f32 %v1616, %v1618
    %v1620 = vadd.f32 %v1619, 0.0036580483
    %v1621 = vmul.f32 %v1616, %v1620
    %v1622 = vadd.f32 %v1621, 0.05243302
    %v1623 = vmul.f32 %v1616, %v1622
    %v1624 = vadd.f32 %v1623, 0.18741608
    %v1625 = vmul.f32 %v1616, %v1624
    %v1626 = vadd.f32 %v1625, 1.1283791
    %v1627 = vmul.f32 %v1613, %v1626
    %v1628 = vmul.f32 %v1616, 3.8918573e-05
    %v1629 = vadd.f32 %v1628, 0.001143296
    %v1630 = vmul.f32 %v1616, %v1629
    %v1631 = vadd.f32 %v1630, 0.014752088
    %v1632 = vmul.f32 %v1616, %v1631
    %v1633 = vadd.f32 %v1632, 0.112945676
    %v1634 = vmul.f32 %v1616, %v1633
    %v1635 = vadd.f32 %v1634, 0.4994258
    %v1636 = vmul.f32 %v1616, %v1635
    %v1637 = vadd.f32 %v1636, 1.0
    %v1638 = vrcp.pop %v1637
    %v1639 = vmul.f32 %v1637, %v1638
    %v1640 = vsub.f32 1.0, %v1639
    %v1641 = vmul.f32 %v1638, %v1640
    %v1642 = vadd.f32 %v1638, %v1641
    %vm1643 = vweird.f32 %v1637
    %vm1644 = vweird.f32 %v1638
    %vm1645 = vmor %vm1643, %vm1644
    %v1646 = vsel %vm1645, %v1638, %v1642
    %v1647 = vand.u32 2147483647, %v1637
    %vm1648 = vcmp.eq.f32.partialorder %v1647, 8.507059e+37
    %v1649 = vand.u32 %v1637, 2147483648
    %v1650 = vor.u32 1.1754944e-38, %v1649
    %v1651 = vsel %vm1648, %v1650, %v1646
    %v1652 = vmul.f32 %v1627, %v1651
    %v1653 = vmin.f32 %v1652, 1.0
    %v1654 = vmax.f32 %v1653, -1.0
    %v1655 = vmul.f32 %v1614, %v1614
    %v1656 = vmin.f32 16.0, %v1655
    %v1657 = vmul.f32 %v1656, 2.1237322e-06
    %v1658 = vadd.f32 %v1657, 0.00028619796
    %v1659 = vmul.f32 %v1656, %v1658
    %v1660 = vadd.f32 %v1659, 0.0036580483
    %v1661 = vmul.f32 %v1656, %v1660
    %v1662 = vadd.f32 %v1661, 0.05243302
    %v1663 = vmul.f32 %v1656, %v1662
    %v1664 = vadd.f32 %v1663, 0.18741608
    %v1665 = vmul.f32 %v1656, %v1664
    %v1666 = vadd.f32 %v1665, 1.1283791
    %v1667 = vmul.f32 %v1614, %v1666
    %v1668 = vmul.f32 %v1656, 3.8918573e-05
    %v1669 = vadd.f32 %v1668, 0.001143296
    %v1670 = vmul.f32 %v1656, %v1669
    %v1671 = vadd.f32 %v1670, 0.014752088
    %v1672 = vmul.f32 %v1656, %v1671
    %v1673 = vadd.f32 %v1672, 0.112945676
    %v1674 = vmul.f32 %v1656, %v1673
    %v1675 = vadd.f32 %v1674, 0.4994258
    %v1676 = vmul.f32 %v1656, %v1675
    %v1677 = vadd.f32 %v1676, 1.0
    %v1678 = vrcp.pop %v1677
    %v1679 = vmul.f32 %v1677, %v1678
    %v1680 = vsub.f32 1.0, %v1679
    %v1681 = vmul.f32 %v1678, %v1680
    %v1682 = vadd.f32 %v1678, %v1681
    %vm1683 = vweird.f32 %v1677
    %vm1684 = vweird.f32 %v1678
    %vm1685 = vmor %vm1683, %vm1684
    %v1686 = vsel %vm1685, %v1678, %v1682
    %v1687 = vand.u32 2147483647, %v1677
    %vm1688 = vcmp.eq.f32.partialorder %v1687, 8.507059e+37
    %v1689 = vand.u32 %v1677, 2147483648
    %v1690 = vor.u32 1.1754944e-38, %v1689
    %v1691 = vsel %vm1688, %v1690, %v1686
    %v1692 = vmul.f32 %v1667, %v1691
    %v1693 = vmin.f32 %v1692, 1.0
    %v1694 = vmax.f32 %v1693, -1.0
    %v1695 = vadd.f32 %v1654, 1.0
    %v1696 = vadd.f32 %v1694, 1.0
    %v1697 = vmul.f32 %v1611, %v1695
    %v1698 = vmul.f32 %v1612, %v1696
    %v1699 = vmul.f32 %v1583, %v1697
    %v1700 = vmul.f32 %v1586, %v1698
    %s1701 = scalar_lea.vmem %s15, 128
    %v1702 = vld [vmem:[%s1701] sm:$0xff]
    %v1703 = vld [vmem:[%s1701 + $0x8] sm:$0xff]
    %v1704 = vld [vmem:[%s1701 + $0x10] sm:$0xff]
    %v1705 = vld [vmem:[%s1701 + $0x18] sm:$0xff]
    %v1706 = vld [vmem:[%s1701 + $0x20] sm:$0xff]
    %v1707 = vld [vmem:[%s1701 + $0x28] sm:$0xff]
    %v1708 = vld [vmem:[%s1701 + $0x30] sm:$0xff]
    %v1709 = vld [vmem:[%s1701 + $0x38] sm:$0xff]
    %v1710 = vld [vmem:[%s1701 + $0x40] sm:$0xff]
    %v1711 = vld [vmem:[%s1701 + $0x48] sm:$0xff]
    %v1712 = vld [vmem:[%s1701 + $0x50] sm:$0xff]
    %v1713 = vld [vmem:[%s1701 + $0x58] sm:$0xff]
    %v1714 = vld [vmem:[%s1701 + $0x60] sm:$0xff]
    %v1715 = vld [vmem:[%s1701 + $0x68] sm:$0xff]
    %v1716 = vld [vmem:[%s1701 + $0x70] sm:$0xff]
    %v1717 = vld [vmem:[%s1701 + $0x78] sm:$0xff]
    %s1718 = scalar_lea.vmem %s16, 1
    %v1719 = vld [vmem:[%s1718] sm:$0x1]
    %v1721 = vperm.slane %v1719, 0
    %1723 = vmatpush.msra.mxu0 %v1717
    %1724 = vmatpush.msra.mxu0 %v1716
    %1725 = vmatpush.msra.mxu0 %v1715
    %1726 = vmatpush.msra.mxu0 %v1714
    %1727 = vmatpush.msra.mxu0 %v1713
    %1728 = vmatpush.msra.mxu0 %v1712
    %1729 = vmatpush.msra.mxu0 %v1711
    %1730 = vmatpush.msra.mxu0 %v1710
    %1731 = vmatpush.msra.mxu0 %v1709
    %1732 = vmatpush.msra.mxu0 %v1708
    %1733 = vmatpush.msra.mxu0 %v1707
    %1734 = vmatpush.msra.mxu0 %v1706
    %1735 = vmatpush.msra.mxu0 %v1705
    %1736 = vmatpush.msra.mxu0 %v1704
    %1737 = vmatpush.msra.mxu0 %v1703
    %1738 = vmatpush.msra.mxu0 %v1702
    %1739 = vmatmul.f32.gmra.mxu0 %v1699
    %v1740 = vpop.f32.mrf.mxu0
    %v1741 = vadd.f32 %v1721, %v1740
    %1742 = vmatmul.f32.gmra.mxu0 %v1700
    %v1743 = vpop.f32.mrf.mxu0
    %v1744 = vadd.f32 %v1721, %v1743
    %1745 = vdwg.mxu0
    %v1746 = vadd.f32 %v1483, %v1741
    %v1747 = vadd.f32 %v1484, %v1744
    %1748 = vst.msk [vmem:[#allocation2] sm:$0xff] %vm65, %v1746
    %1749 = vst.msk [vmem:[#allocation2 + $0x8] sm:$0xff] %vm65, %v1747
    // Predicated region
    $region70: #{tpu_custom_call.1} parent=1 // pred_check
      _
    $region71: #{tpu_custom_call.1} parent=1 // pred_check_branch
      %1751 = sbr.rel (0) target = $region73
    $region72: #{tpu_custom_call.1} parent=1 // pred_region
      %1753 = vsyncadd [#allocation3], 0
      %s1754 = sshll.u32 [#allocation2], 4
      %s1755 = int_to_ptr.vmem [resolvable:$true] %s1754
      %s1756 = sshll.u32 %s17, 4
      %s1757 = int_to_ptr.hbm [resolvable:$true] %s1756
      %1762 = dma.vmem_to_hbm [thread:$0]  %s1755, 256, %s1757, [#allocation3], 128, 128, 8
    $region73: #{tpu_custom_call.1} parent=1 // pred_fallthru
      _
    // Predicated region
    $region74: #{tpu_custom_call.1} parent=1 // pred_check
      _
    $region75: #{tpu_custom_call.1} parent=1 // pred_check_branch
      %1764 = sbr.rel (0) target = $region77
    $region76: #{tpu_custom_call.1} parent=1 // pred_region
      %1766 = dma.done [#allocation3], 256
    $region77: #{tpu_custom_call.1} parent=1 // pred_fallthru
      _
    %1767 = vsyncpa [#allocation3], 1

</llo_original>
